<compile_context>
chip_gen: v5e
topology: v5e:2x2
jax: 0.10.0
libtpu: 0.0.40
codegen_flags: <defaults>
</compile_context>

<pallas_src>
import functools

import jax
import jax.numpy as jnp
from jax.experimental import pallas as pl
from jax.experimental.pallas import tpu as pltpu


# --------------------------------------------------------------------------
# tiling helpers
# --------------------------------------------------------------------------


def _pick_tile(dim, target, align):
    """Tile for a matmul dim: full dim if small, else the largest aligned
    divisor <= target, else the aligned target (caller zero-pads)."""
    if dim <= target:
        return dim
    t = (target // align) * align
    while t >= align:
        if dim % t == 0:
            return t
        t -= align
    return (target // align) * align   # ragged: wrapper pads to a multiple


def _pick_divisor_tile(dim, target, align=8):
    """Tile that must divide dim exactly (used for attention, where padding
    the KV axis would change the softmax)."""
    if dim <= target:
        return dim
    t = (target // align) * align
    while t >= align:
        if dim % t == 0:
            return t
        t -= align
    # TODO(synk): add in-kernel KV masking for ragged N; full-N fallback.
    return dim


def _round_up(x, m):
    return -(-x // m) * m


# --------------------------------------------------------------------------
# tiled matmul with optional fused LayerNorm prologue and fused
# bias / GELU / residual epilogue.  bf16 MXU operands, f32 accumulation.
# --------------------------------------------------------------------------


def _matmul_kernel(*refs, has_ln, has_bias, has_residual, activation, ln_eps):
    # ref order: x, w, [ln_g, ln_b], [bias], [residual], out, acc_scratch
    idx = 0
    x_ref = refs[idx]; idx += 1
    w_ref = refs[idx]; idx += 1
    if has_ln:
        g_ref = refs[idx]; bln_ref = refs[idx + 1]; idx += 2
    if has_bias:
        bias_ref = refs[idx]; idx += 1
    if has_residual:
        res_ref = refs[idx]; idx += 1
    o_ref, acc_ref = refs[idx], refs[idx + 1]

    k = pl.program_id(2)

    @pl.when(k == 0)
    def _():
        acc_ref[...] = jnp.zeros_like(acc_ref)

    x = x_ref[...].astype(jnp.float32)
    if has_ln:
        # Fused LayerNorm prologue (requires the K axis un-tiled: tk == K).
        mu = jnp.mean(x, axis=-1, keepdims=True)
        xc = x - mu
        var = jnp.mean(xc * xc, axis=-1, keepdims=True)
        x = xc * jax.lax.rsqrt(var + ln_eps)
        x = x * g_ref[...].astype(jnp.float32) + bln_ref[...].astype(jnp.float32)

    # bf16 operands on the MXU, f32 accumulation.
    acc_ref[...] += jnp.dot(
        x.astype(jnp.bfloat16),
        w_ref[...].astype(jnp.bfloat16),
        preferred_element_type=jnp.float32,
    )

    @pl.when(k == pl.num_programs(2) - 1)
    def _():
        acc = acc_ref[...]
        if has_bias:
            acc = acc + bias_ref[...].astype(jnp.float32)
        if activation == "gelu":
            # tanh approximation of GELU (PyTorch nn.GELU exact-erf differs by
            # ~1e-3); tanh is guaranteed to lower to the EUP on all TPU gens.
            acc = jax.nn.gelu(acc, approximate=True)
        if has_residual:
            acc = acc + res_ref[...].astype(jnp.float32)
        o_ref[...] = acc.astype(o_ref.dtype)


def _tiled_matmul(x, w, bias=None, residual=None, activation=None,
                  ln_params=None, tm=512, tn=512, tk=1024):
    M, K = x.shape
    Kw, Nout = w.shape
    assert K == Kw
    has_ln = ln_params is not None
    has_bias = bias is not None
    has_residual = residual is not None

    tm = _pick_tile(M, tm, 8)
    tn = _pick_tile(Nout, tn, 128)
    tk = K if has_ln else _pick_tile(K, tk, 128)   # LN needs the full row

    # Zero-pad ragged edges (exact: zero K columns contribute nothing, padded
    # M rows / N cols are sliced off after the call).
    Mp, Np, Kp = _round_up(M, tm), _round_up(Nout, tn), _round_up(K, tk)
    xp = x if (Mp == M and Kp == K) else jnp.pad(x, ((0, Mp - M), (0, Kp - K)))
    wp = w if (Kp == K and Np == Nout) else jnp.pad(w, ((0, Kp - K), (0, Np - Nout)))

    grid = (Mp // tm, Np // tn, Kp // tk)

    in_specs = [
        pl.BlockSpec((tm, tk), lambda i, j, k: (i, k)),
        pl.BlockSpec((tk, tn), lambda i, j, k: (k, j)),
    ]
    args = [xp, wp]
    ln_eps = 1e-5
    if has_ln:
        g, b_ln, ln_eps = ln_params
        in_specs += [pl.BlockSpec((1, tk), lambda i, j, k: (0, 0)),
                     pl.BlockSpec((1, tk), lambda i, j, k: (0, 0))]
        args += [g, b_ln]
    if has_bias:
        bp = bias if Np == Nout else jnp.pad(bias, ((0, 0), (0, Np - Nout)))
        in_specs.append(pl.BlockSpec((1, tn), lambda i, j, k: (0, j)))
        args.append(bp)
    if has_residual:
        rp = residual if (Mp == M and Np == Nout) else jnp.pad(
            residual, ((0, Mp - M), (0, Np - Nout)))
        in_specs.append(pl.BlockSpec((tm, tn), lambda i, j, k: (i, j)))
        args.append(rp)

    kernel = functools.partial(
        _matmul_kernel, has_ln=has_ln, has_bias=has_bias,
        has_residual=has_residual, activation=activation, ln_eps=ln_eps,
    )
    out = pl.pallas_call(
        kernel,
        out_shape=jax.ShapeDtypeStruct((Mp, Np), x.dtype),
        grid=grid,
        in_specs=in_specs,
        out_specs=pl.BlockSpec((tm, tn), lambda i, j, k: (i, j)),
        scratch_shapes=[pltpu.VMEM((tm, tn), jnp.float32)],
        compiler_params=pltpu.CompilerParams(
            dimension_semantics=("parallel", "parallel", "arbitrary")),
    )(*args)
    if Mp != M or Np != Nout:
        out = out[:M, :Nout]
    return out


# --------------------------------------------------------------------------
# standalone LayerNorm (fallback only, for very large feature dims)
# --------------------------------------------------------------------------


def _layernorm_kernel(x_ref, g_ref, b_ref, o_ref, *, eps):
    x = x_ref[...].astype(jnp.float32)
    mean = jnp.mean(x, axis=-1, keepdims=True)
    xc = x - mean
    var = jnp.mean(xc * xc, axis=-1, keepdims=True)
    inv = jax.lax.rsqrt(var + eps)
    y = xc * inv * g_ref[...].astype(jnp.float32) + b_ref[...].astype(jnp.float32)
    o_ref[...] = y.astype(o_ref.dtype)


def _layernorm(x, gamma, beta, eps=1e-5, tm=512):
    M, D = x.shape
    tm = _pick_divisor_tile(M, tm, 8)
    kernel = functools.partial(_layernorm_kernel, eps=eps)
    return pl.pallas_call(
        kernel,
        out_shape=jax.ShapeDtypeStruct((M, D), x.dtype),
        grid=(M // tm,),
        in_specs=[
            pl.BlockSpec((tm, D), lambda i: (i, 0)),
            pl.BlockSpec((1, D), lambda i: (0, 0)),
            pl.BlockSpec((1, D), lambda i: (0, 0)),
        ],
        out_specs=pl.BlockSpec((tm, D), lambda i: (i, 0)),
        compiler_params=pltpu.CompilerParams(dimension_semantics=("parallel",)),
    )(x, gamma, beta)


# --------------------------------------------------------------------------
# flash-style multi-head attention (online softmax over KV tiles)
#   q, k, v: (B*heads, N, dim_head)  ->  out: (B*heads, N, dim_head)
# --------------------------------------------------------------------------


def _flash_attention_kernel(q_ref, k_ref, v_ref, o_ref, m_ref, l_ref, acc_ref,
                            *, scale):
    ki = pl.program_id(2)

    @pl.when(ki == 0)
    def _():
        m_ref[...] = jnp.full_like(m_ref, -jnp.inf)
        l_ref[...] = jnp.zeros_like(l_ref)
        acc_ref[...] = jnp.zeros_like(acc_ref)

    # Scale folded into q (f32), then bf16 operands on the MXU.
    q = (q_ref[...].astype(jnp.float32) * scale).astype(jnp.bfloat16)
    k = k_ref[...].astype(jnp.bfloat16)
    s = jax.lax.dot_general(
        q, k, (((1,), (1,)), ((), ())),
        preferred_element_type=jnp.float32)                 # (tq, tkv)

    m_prev = m_ref[...]
    m_new = jnp.maximum(m_prev, jnp.max(s, axis=-1, keepdims=True))
    alpha = jnp.exp(m_prev - m_new)
    p = jnp.exp(s - m_new)
    l_ref[...] = alpha * l_ref[...] + jnp.sum(p, axis=-1, keepdims=True)
    acc_ref[...] = alpha * acc_ref[...] + jnp.dot(
        p.astype(jnp.bfloat16), v_ref[...].astype(jnp.bfloat16),
        preferred_element_type=jnp.float32)
    m_ref[...] = m_new

    @pl.when(ki == pl.num_programs(2) - 1)
    def _():
        # Exact final normalization (keeps the error budget for bf16).
        o_ref[...] = (acc_ref[...] / l_ref[...]).astype(o_ref.dtype)


def _flash_attention(q, k, v, scale, tq=512, tkv=512):
    BH, N, dh = q.shape
    tq = _pick_divisor_tile(N, tq, 8)
    tkv = _pick_divisor_tile(N, tkv, 8)
    grid = (BH, N // tq, N // tkv)
    kernel = functools.partial(_flash_attention_kernel, scale=scale)
    return pl.pallas_call(
        kernel,
        out_shape=jax.ShapeDtypeStruct((BH, N, dh), q.dtype),
        grid=grid,
        in_specs=[
            pl.BlockSpec((None, tq, dh), lambda b, qi, ki: (b, qi, 0)),
            pl.BlockSpec((None, tkv, dh), lambda b, qi, ki: (b, ki, 0)),
            pl.BlockSpec((None, tkv, dh), lambda b, qi, ki: (b, ki, 0)),
        ],
        out_specs=pl.BlockSpec((None, tq, dh), lambda b, qi, ki: (b, qi, 0)),
        scratch_shapes=[
            pltpu.VMEM((tq, 1), jnp.float32),     # running max m
            pltpu.VMEM((tq, 1), jnp.float32),     # running denom l
            pltpu.VMEM((tq, dh), jnp.float32),    # unnormalized accumulator
        ],
        compiler_params=pltpu.CompilerParams(
            dimension_semantics=("parallel", "parallel", "arbitrary")),
    )(q, k, v)


# --------------------------------------------------------------------------
# Transformer forward (stack of TransformerBlocks)
# --------------------------------------------------------------------------

_MAX_FUSED_LN_K = 2048   # above this, fall back to a standalone LayerNorm


def transformer_forward(x, layers, *, heads, dim_head):
    B, N, D = x.shape
    inner = heads * dim_head
    M = B * N
    scale = dim_head ** (-0.5)
    x2d = x.reshape(M, D)

    for p in layers:
        # ---- attention branch: x = x + Wout @ MHA(LN1(x)) + bout ----------
        if D <= _MAX_FUSED_LN_K:
            qkv = _tiled_matmul(x2d, p["w_qkv"],
                                ln_params=(p["ln1_g"], p["ln1_b"], 1e-5))
        else:
            xn = _layernorm(x2d, p["ln1_g"], p["ln1_b"])
            qkv = _tiled_matmul(xn, p["w_qkv"])               # (M, 3*inner)

        # 'b n (three h d) -> three (b h) n d' rearrange (single XLA pass)
        qkv = qkv.reshape(B, N, 3, heads, dim_head)
        qkv = qkv.transpose(2, 0, 3, 1, 4).reshape(3, B * heads, N, dim_head)
        ctx = _flash_attention(qkv[0], qkv[1], qkv[2], scale)  # (BH, N, dh)
        ctx = ctx.reshape(B, heads, N, dim_head).transpose(0, 2, 1, 3)
        ctx = ctx.reshape(M, inner)

        x2d = _tiled_matmul(ctx, p["w_out"], bias=p["b_out"], residual=x2d)

        # ---- feed-forward branch: x = x + W2 @ gelu(W1 @ LN2(x) + b1) + b2
        if D <= _MAX_FUSED_LN_K:
            h = _tiled_matmul(x2d, p["w1"], bias=p["b1"], activation="gelu",
                              ln_params=(p["ln2_g"], p["ln2_b"], 1e-5))
        else:
            xn2 = _layernorm(x2d, p["ln2_g"], p["ln2_b"])
            h = _tiled_matmul(xn2, p["w1"], bias=p["b1"], activation="gelu")
        x2d = _tiled_matmul(h, p["w2"], bias=p["b2"], residual=x2d)

    return x2d.reshape(B, N, D)


# --------------------------------------------------------------------------
# plain-JAX reference (f32, exact softmax)
# --------------------------------------------------------------------------


def _reference_transformer(x, layers, *, heads, dim_head):
    def layernorm(y, g, b, eps=1e-5):
        mu = jnp.mean(y, -1, keepdims=True)
        var = jnp.mean((y - mu) ** 2, -1, keepdims=True)
        return (y - mu) / jnp.sqrt(var + eps) * g + b

    B, N, D = x.shape
    inner = heads * dim_head
    scale = dim_head ** (-0.5)

    for p in layers:
        xn = layernorm(x, p["ln1_g"][0], p["ln1_b"][0])
        qkv = xn @ p["w_qkv"]
        q, k, v = jnp.split(qkv, 3, axis=-1)
        q = q.reshape(B, N, heads, dim_head).transpose(0, 2, 1, 3)
        k = k.reshape(B, N, heads, dim_head).transpose(0, 2, 1, 3)
        v = v.reshape(B, N, heads, dim_head).transpose(0, 2, 1, 3)
        dots = jnp.einsum("bhid,bhjd->bhij", q, k) * scale
        attn = jax.nn.softmax(dots, axis=-1)
        out = jnp.einsum("bhij,bhjd->bhid", attn, v)
        out = out.transpose(0, 2, 1, 3).reshape(B, N, inner)
        x = x + out @ p["w_out"] + p["b_out"][0]

        xn2 = layernorm(x, p["ln2_g"][0], p["ln2_b"][0])
        hmid = jax.nn.gelu(xn2 @ p["w1"] + p["b1"][0], approximate=True)
        x = x + hmid @ p["w2"] + p["b2"][0]
    return x


# --------------------------------------------------------------------------
# main
# --------------------------------------------------------------------------

if __name__ == "__main__":
    # small shapes consistent with the module
    B, N, DIM = 2, 8, 32
    DEPTH, HEADS, DIM_HEAD, MLP_DIM = 2, 4, 16, 64
    INNER = HEADS * DIM_HEAD

    key = jax.random.PRNGKey(0)
    kx, kp = jax.random.split(key)
    x = jax.random.normal(kx, (B, N, DIM), dtype=jnp.float32)

    def init_layer(k):
        ks = jax.random.split(k, 11)
        s = 0.05
        return dict(
            ln1_g=1.0 + 0.1 * jax.random.normal(ks[0], (1, DIM), jnp.float32),
            ln1_b=0.1 * jax.random.normal(ks[1], (1, DIM), jnp.float32),
            w_qkv=s * jax.random.normal(ks[2], (DIM, 3 * INNER), jnp.float32),
            w_out=s * jax.random.normal(ks[3], (INNER, DIM), jnp.float32),
            b_out=s * jax.random.normal(ks[4], (1, DIM), jnp.float32),
            ln2_g=1.0 + 0.1 * jax.random.normal(ks[5], (1, DIM), jnp.float32),
            ln2_b=0.1 * jax.random.normal(ks[6], (1, DIM), jnp.float32),
            w1=s * jax.random.normal(ks[7], (DIM, MLP_DIM), jnp.float32),
            b1=s * jax.random.normal(ks[8], (1, MLP_DIM), jnp.float32),
            w2=s * jax.random.normal(ks[9], (MLP_DIM, DIM), jnp.float32),
            b2=s * jax.random.normal(ks[10], (1, DIM), jnp.float32),
        )

    layer_keys = jax.random.split(kp, DEPTH)
    layers = [init_layer(k) for k in layer_keys]

    fwd = jax.jit(functools.partial(
        transformer_forward, heads=HEADS, dim_head=DIM_HEAD))
    y = fwd(x, layers)
    jax.block_until_ready(y)

    y_ref = _reference_transformer(x, layers, heads=HEADS, dim_head=DIM_HEAD)
    assert y.shape == (B, N, DIM)
    # Tolerance accounts for bf16 MXU operands (f32 accumulation) vs. the f32
    # reference; observed error is ~1e-3, tolerance 2e-2 leaves margin.
    assert jnp.allclose(y, y_ref, atol=2e-2, rtol=2e-2), (
        float(jnp.max(jnp.abs(y - y_ref)))
    )

    print("KERNEL_OK")
</pallas_src>

<mosaic_0001>
module attributes {stable_mosaic.version = 11 : i64} {
  func.func @_matmul_kernel(%arg0: i32, %arg1: i32, %arg2: i32, %arg3: memref<16x32xf32, #tpu.memory_space<vmem>>, %arg4: memref<32x192xf32, #tpu.memory_space<vmem>>, %arg5: memref<1x32xf32, #tpu.memory_space<vmem>>, %arg6: memref<1x32xf32, #tpu.memory_space<vmem>>, %arg7: memref<16x192xf32, #tpu.memory_space<vmem>>, %arg8: memref<16x192xf32, #tpu.memory_space<vmem>>) attributes {dimension_semantics = [#tpu.dimension_semantics<parallel>, #tpu.dimension_semantics<parallel>, #tpu.dimension_semantics<arbitrary>], iteration_bounds = array<i64: 1, 1, 1>, scalar_prefetch = 0 : i64, scratch_operands = 1 : i64, tpu.core_type = #tpu.core_type<tc>, window_params = [{transform_indices = @transform_0, window_bounds = array<i64: 16, 32>}, {transform_indices = @transform_1, window_bounds = array<i64: 32, 192>}, {pipeline_mode = #tpu.pipeline_mode<synchronous>, transform_indices = @transform_2, window_bounds = array<i64: 1, 32>}, {pipeline_mode = #tpu.pipeline_mode<synchronous>, transform_indices = @transform_3, window_bounds = array<i64: 1, 32>}, {transform_indices = @transform_4, window_bounds = array<i64: 16, 192>}]} {
    %c0_i32 = arith.constant 0 : i32
    %0 = arith.cmpi eq, %arg2, %c0_i32 : i32
    %1 = arith.extui %0 : i1 to i32
    %c0_i32_0 = arith.constant 0 : i32
    %2 = arith.cmpi ne, %1, %c0_i32_0 : i32
    scf.if %2 {
      %cst_19 = arith.constant 0.000000e+00 : f32
      %36 = vector.broadcast %cst_19 : f32 to vector<16x192xf32>
      %c0_20 = arith.constant 0 : index
      %c0_21 = arith.constant 0 : index
      %37 = vector.load %arg8[%c0_20, %c0_21] : memref<16x192xf32, #tpu.memory_space<vmem>>, vector<16x192xf32>
      tpu.vector_store %arg8[%c0_20, %c0_21], %36 {strides = array<i32>} : memref<16x192xf32, #tpu.memory_space<vmem>>, vector<16x192xf32>,
    } else {
    }
    %c0 = arith.constant 0 : index
    %c0_1 = arith.constant 0 : index
    %3 = vector.load %arg3[%c0, %c0_1] : memref<16x32xf32, #tpu.memory_space<vmem>>, vector<16x32xf32>
    %cst = arith.constant dense<0.000000e+00> : vector<16xf32>
    %4 = vector.multi_reduction <add>, %3, %cst [1] : vector<16x32xf32> to vector<16xf32>
    %5 = vector.shape_cast %4 : vector<16xf32> to vector<16x1xf32>
    %cst_2 = arith.constant 3.200000e+01 : f32
    %6 = vector.broadcast %cst_2 : f32 to vector<16x1xf32>
    %7 = arith.divf %5, %6 : vector<16x1xf32>
    %8 = vector.broadcast %7 : vector<16x1xf32> to vector<16x32xf32>
    %9 = arith.subf %3, %8 : vector<16x32xf32>
    %10 = arith.mulf %9, %9 : vector<16x32xf32>
    %cst_3 = arith.constant dense<0.000000e+00> : vector<16xf32>
    %11 = vector.multi_reduction <add>, %10, %cst_3 [1] : vector<16x32xf32> to vector<16xf32>
    %12 = vector.shape_cast %11 : vector<16xf32> to vector<16x1xf32>
    %cst_4 = arith.constant 3.200000e+01 : f32
    %13 = vector.broadcast %cst_4 : f32 to vector<16x1xf32>
    %14 = arith.divf %12, %13 : vector<16x1xf32>
    %cst_5 = arith.constant 9.99999974E-6 : f32
    %15 = vector.broadcast %cst_5 : f32 to vector<16x1xf32>
    %16 = arith.addf %14, %15 : vector<16x1xf32>
    %17 = math.rsqrt %16 : vector<16x1xf32>
    %18 = vector.broadcast %17 : vector<16x1xf32> to vector<16x32xf32>
    %19 = arith.mulf %9, %18 : vector<16x32xf32>
    %c0_6 = arith.constant 0 : index
    %c0_7 = arith.constant 0 : index
    %20 = vector.load %arg5[%c0_6, %c0_7] : memref<1x32xf32, #tpu.memory_space<vmem>>, vector<1x32xf32>
    %21 = vector.broadcast %20 : vector<1x32xf32> to vector<16x32xf32>
    %22 = arith.mulf %19, %21 : vector<16x32xf32>
    %c0_8 = arith.constant 0 : index
    %c0_9 = arith.constant 0 : index
    %23 = vector.load %arg6[%c0_8, %c0_9] : memref<1x32xf32, #tpu.memory_space<vmem>>, vector<1x32xf32>
    %24 = vector.broadcast %23 : vector<1x32xf32> to vector<16x32xf32>
    %25 = arith.addf %22, %24 : vector<16x32xf32>
    %c0_10 = arith.constant 0 : index
    %c0_11 = arith.constant 0 : index
    %26 = vector.load %arg8[%c0_10, %c0_11] : memref<16x192xf32, #tpu.memory_space<vmem>>, vector<16x192xf32>
    %27 = arith.truncf %25 : vector<16x32xf32> to vector<16x32xbf16>
    %c0_12 = arith.constant 0 : index
    %c0_13 = arith.constant 0 : index
    %28 = vector.load %arg4[%c0_12, %c0_13] : memref<32x192xf32, #tpu.memory_space<vmem>>, vector<32x192xf32>
    %29 = arith.truncf %28 : vector<32x192xf32> to vector<32x192xbf16>
    %cst_14 = arith.constant dense<0.000000e+00> : vector<16x192xf32>
    %30 = tpu.matmul %27, %29, %cst_14 {dimension_numbers = #tpu.dot_dimension_numbers<[1], [0], [0], [1], [0, 0, 1, 1], [], []>} : vector<16x32xbf16>, vector<32x192xbf16>, vector<16x192xf32> -> vector<16x192xf32>
    %31 = arith.addf %26, %30 : vector<16x192xf32>
    %c0_15 = arith.constant 0 : index
    %c0_16 = arith.constant 0 : index
    %32 = vector.load %arg8[%c0_15, %c0_16] : memref<16x192xf32, #tpu.memory_space<vmem>>, vector<16x192xf32>
    tpu.vector_store %arg8[%c0_15, %c0_16], %31 {strides = array<i32>} : memref<16x192xf32, #tpu.memory_space<vmem>>, vector<16x192xf32>,
    %c0_i32_17 = arith.constant 0 : i32
    %33 = arith.cmpi eq, %arg2, %c0_i32_17 : i32
    %34 = arith.extui %33 : i1 to i32
    %c0_i32_18 = arith.constant 0 : i32
    %35 = arith.cmpi ne, %34, %c0_i32_18 : i32
    scf.if %35 {
      %c0_19 = arith.constant 0 : index
      %c0_20 = arith.constant 0 : index
      %36 = vector.load %arg8[%c0_19, %c0_20] : memref<16x192xf32, #tpu.memory_space<vmem>>, vector<16x192xf32>
      %c0_21 = arith.constant 0 : index
      %c0_22 = arith.constant 0 : index
      %37 = vector.load %arg7[%c0_21, %c0_22] : memref<16x192xf32, #tpu.memory_space<vmem>>, vector<16x192xf32>
      tpu.vector_store %arg7[%c0_21, %c0_22], %36 {strides = array<i32>} : memref<16x192xf32, #tpu.memory_space<vmem>>, vector<16x192xf32>,
    } else {
    }
    return
  }
  func.func @transform_0(%arg0: i32, %arg1: i32, %arg2: i32) -> (i32, i32) {
    %c0_i32 = arith.constant 0 : i32
    return %arg0, %arg2 : i32, i32
  }
  func.func @transform_1(%arg0: i32, %arg1: i32, %arg2: i32) -> (i32, i32) {
    %c0_i32 = arith.constant 0 : i32
    return %arg2, %arg1 : i32, i32
  }
  func.func @transform_2(%arg0: i32, %arg1: i32, %arg2: i32) -> (i32, i32) {
    %c0_i32 = arith.constant 0 : i32
    %c0_i32_0 = arith.constant 0 : i32
    %c0_i32_1 = arith.constant 0 : i32
    return %c0_i32, %c0_i32_0 : i32, i32
  }
  func.func @transform_3(%arg0: i32, %arg1: i32, %arg2: i32) -> (i32, i32) {
    %c0_i32 = arith.constant 0 : i32
    %c0_i32_0 = arith.constant 0 : i32
    %c0_i32_1 = arith.constant 0 : i32
    return %c0_i32, %c0_i32_0 : i32, i32
  }
  func.func @transform_4(%arg0: i32, %arg1: i32, %arg2: i32) -> (i32, i32) {
    %c0_i32 = arith.constant 0 : i32
    return %arg0, %arg1 : i32, i32
  }
}

module attributes {stable_mosaic.version = 11 : i64} {
  func.func @_flash_attention_kernel(%arg0: i32, %arg1: i32, %arg2: i32, %arg3: memref<1x8x16xf32, #tpu.memory_space<vmem>>, %arg4: memref<1x8x16xf32, #tpu.memory_space<vmem>>, %arg5: memref<1x8x16xf32, #tpu.memory_space<vmem>>, %arg6: memref<1x8x16xf32, #tpu.memory_space<vmem>>, %arg7: memref<8x1xf32, #tpu.memory_space<vmem>>, %arg8: memref<8x1xf32, #tpu.memory_space<vmem>>, %arg9: memref<8x16xf32, #tpu.memory_space<vmem>>) attributes {dimension_semantics = [#tpu.dimension_semantics<parallel>, #tpu.dimension_semantics<parallel>, #tpu.dimension_semantics<arbitrary>], iteration_bounds = array<i64: 8, 1, 1>, scalar_prefetch = 0 : i64, scratch_operands = 3 : i64, tpu.core_type = #tpu.core_type<tc>, window_params = [{transform_indices = @transform_0, window_bounds = array<i64: 1, 8, 16>}, {transform_indices = @transform_1, window_bounds = array<i64: 1, 8, 16>}, {transform_indices = @transform_2, window_bounds = array<i64: 1, 8, 16>}, {transform_indices = @transform_3, window_bounds = array<i64: 1, 8, 16>}]} {
    %c0_i32 = arith.constant 0 : i32
    %0 = arith.cmpi eq, %arg2, %c0_i32 : i32
    %1 = arith.extui %0 : i1 to i32
    %c0_i32_0 = arith.constant 0 : i32
    %2 = arith.cmpi ne, %1, %c0_i32_0 : i32
    scf.if %2 {
      %cst_27 = arith.constant 0xFF800000 : f32
      %41 = vector.broadcast %cst_27 : f32 to vector<8x1xf32>
      %c0_28 = arith.constant 0 : index
      %c0_29 = arith.constant 0 : index
      %42 = vector.load %arg7[%c0_28, %c0_29] : memref<8x1xf32, #tpu.memory_space<vmem>>, vector<8x1xf32>
      tpu.vector_store %arg7[%c0_28, %c0_29], %41 {strides = array<i32>} : memref<8x1xf32, #tpu.memory_space<vmem>>, vector<8x1xf32>,
      %cst_30 = arith.constant 0.000000e+00 : f32
      %43 = vector.broadcast %cst_30 : f32 to vector<8x1xf32>
      %c0_31 = arith.constant 0 : index
      %c0_32 = arith.constant 0 : index
      %44 = vector.load %arg8[%c0_31, %c0_32] : memref<8x1xf32, #tpu.memory_space<vmem>>, vector<8x1xf32>
      tpu.vector_store %arg8[%c0_31, %c0_32], %43 {strides = array<i32>} : memref<8x1xf32, #tpu.memory_space<vmem>>, vector<8x1xf32>,
      %cst_33 = arith.constant 0.000000e+00 : f32
      %45 = vector.broadcast %cst_33 : f32 to vector<8x16xf32>
      %c0_34 = arith.constant 0 : index
      %c0_35 = arith.constant 0 : index
      %46 = vector.load %arg9[%c0_34, %c0_35] : memref<8x16xf32, #tpu.memory_space<vmem>>, vector<8x16xf32>
      tpu.vector_store %arg9[%c0_34, %c0_35], %45 {strides = array<i32>} : memref<8x16xf32, #tpu.memory_space<vmem>>, vector<8x16xf32>,
    } else {
    }
    %c0 = arith.constant 0 : index
    %c0_1 = arith.constant 0 : index
    %c0_2 = arith.constant 0 : index
    %3 = vector.load %arg3[%c0, %c0_1, %c0_2] : memref<1x8x16xf32, #tpu.memory_space<vmem>>, vector<1x8x16xf32>
    %4 = vector.shape_cast %3 : vector<1x8x16xf32> to vector<8x16xf32>
    %cst = arith.constant 2.500000e-01 : f32
    %5 = vector.broadcast %cst : f32 to vector<8x16xf32>
    %6 = arith.mulf %4, %5 : vector<8x16xf32>
    %7 = arith.truncf %6 : vector<8x16xf32> to vector<8x16xbf16>
    %c0_3 = arith.constant 0 : index
    %c0_4 = arith.constant 0 : index
    %c0_5 = arith.constant 0 : index
    %8 = vector.load %arg4[%c0_3, %c0_4, %c0_5] : memref<1x8x16xf32, #tpu.memory_space<vmem>>, vector<1x8x16xf32>
    %9 = vector.shape_cast %8 : vector<1x8x16xf32> to vector<8x16xf32>
    %10 = arith.truncf %9 : vector<8x16xf32> to vector<8x16xbf16>
    %cst_6 = arith.constant dense<0.000000e+00> : vector<8x8xf32>
    %11 = tpu.matmul %7, %10, %cst_6 {dimension_numbers = #tpu.dot_dimension_numbers<[1], [1], [0], [0], [0, 0, 1, 0], [], []>} : vector<8x16xbf16>, vector<8x16xbf16>, vector<8x8xf32> -> vector<8x8xf32>
    %c0_7 = arith.constant 0 : index
    %c0_8 = arith.constant 0 : index
    %12 = vector.load %arg7[%c0_7, %c0_8] : memref<8x1xf32, #tpu.memory_space<vmem>>, vector<8x1xf32>
    %cst_9 = arith.constant dense<0xFF800000> : vector<8xf32>
    %13 = vector.multi_reduction <maximumf>, %11, %cst_9 [1] : vector<8x8xf32> to vector<8xf32>
    %14 = vector.shape_cast %13 : vector<8xf32> to vector<8x1xf32>
    %15 = arith.maximumf %12, %14 : vector<8x1xf32>
    %16 = arith.subf %12, %15 : vector<8x1xf32>
    %17 = math.exp %16 : vector<8x1xf32>
    %18 = vector.broadcast %15 : vector<8x1xf32> to vector<8x8xf32>
    %19 = arith.subf %11, %18 : vector<8x8xf32>
    %20 = math.exp %19 : vector<8x8xf32>
    %c0_10 = arith.constant 0 : index
    %c0_11 = arith.constant 0 : index
    %21 = vector.load %arg8[%c0_10, %c0_11] : memref<8x1xf32, #tpu.memory_space<vmem>>, vector<8x1xf32>
    %22 = arith.mulf %17, %21 : vector<8x1xf32>
    %cst_12 = arith.constant dense<0.000000e+00> : vector<8xf32>
    %23 = vector.multi_reduction <add>, %20, %cst_12 [1] : vector<8x8xf32> to vector<8xf32>
    %24 = vector.shape_cast %23 : vector<8xf32> to vector<8x1xf32>
    %25 = arith.addf %22, %24 : vector<8x1xf32>
    %c0_13 = arith.constant 0 : index
    %c0_14 = arith.constant 0 : index
    %26 = vector.load %arg8[%c0_13, %c0_14] : memref<8x1xf32, #tpu.memory_space<vmem>>, vector<8x1xf32>
    tpu.vector_store %arg8[%c0_13, %c0_14], %25 {strides = array<i32>} : memref<8x1xf32, #tpu.memory_space<vmem>>, vector<8x1xf32>,
    %c0_15 = arith.constant 0 : index
    %c0_16 = arith.constant 0 : index
    %27 = vector.load %arg9[%c0_15, %c0_16] : memref<8x16xf32, #tpu.memory_space<vmem>>, vector<8x16xf32>
    %28 = vector.broadcast %17 : vector<8x1xf32> to vector<8x16xf32>
    %29 = arith.mulf %28, %27 : vector<8x16xf32>
    %30 = arith.truncf %20 : vector<8x8xf32> to vector<8x8xbf16>
    %c0_17 = arith.constant 0 : index
    %c0_18 = arith.constant 0 : index
    %c0_19 = arith.constant 0 : index
    %31 = vector.load %arg5[%c0_17, %c0_18, %c0_19] : memref<1x8x16xf32, #tpu.memory_space<vmem>>, vector<1x8x16xf32>
    %32 = vector.shape_cast %31 : vector<1x8x16xf32> to vector<8x16xf32>
    %33 = arith.truncf %32 : vector<8x16xf32> to vector<8x16xbf16>
    %cst_20 = arith.constant dense<0.000000e+00> : vector<8x16xf32>
    %34 = tpu.matmul %30, %33, %cst_20 {dimension_numbers = #tpu.dot_dimension_numbers<[1], [0], [0], [1], [0, 0, 1, 1], [], []>} : vector<8x8xbf16>, vector<8x16xbf16>, vector<8x16xf32> -> vector<8x16xf32>
    %35 = arith.addf %29, %34 : vector<8x16xf32>
    %c0_21 = arith.constant 0 : index
    %c0_22 = arith.constant 0 : index
    %36 = vector.load %arg9[%c0_21, %c0_22] : memref<8x16xf32, #tpu.memory_space<vmem>>, vector<8x16xf32>
    tpu.vector_store %arg9[%c0_21, %c0_22], %35 {strides = array<i32>} : memref<8x16xf32, #tpu.memory_space<vmem>>, vector<8x16xf32>,
    %c0_23 = arith.constant 0 : index
    %c0_24 = arith.constant 0 : index
    %37 = vector.load %arg7[%c0_23, %c0_24] : memref<8x1xf32, #tpu.memory_space<vmem>>, vector<8x1xf32>
    tpu.vector_store %arg7[%c0_23, %c0_24], %15 {strides = array<i32>} : memref<8x1xf32, #tpu.memory_space<vmem>>, vector<8x1xf32>,
    %c0_i32_25 = arith.constant 0 : i32
    %38 = arith.cmpi eq, %arg2, %c0_i32_25 : i32
    %39 = arith.extui %38 : i1 to i32
    %c0_i32_26 = arith.constant 0 : i32
    %40 = arith.cmpi ne, %39, %c0_i32_26 : i32
    scf.if %40 {
      %c0_27 = arith.constant 0 : index
      %c0_28 = arith.constant 0 : index
      %41 = vector.load %arg9[%c0_27, %c0_28] : memref<8x16xf32, #tpu.memory_space<vmem>>, vector<8x16xf32>
      %c0_29 = arith.constant 0 : index
      %c0_30 = arith.constant 0 : index
      %42 = vector.load %arg8[%c0_29, %c0_30] : memref<8x1xf32, #tpu.memory_space<vmem>>, vector<8x1xf32>
      %43 = vector.broadcast %42 : vector<8x1xf32> to vector<8x16xf32>
      %44 = arith.divf %41, %43 : vector<8x16xf32>
      %c0_31 = arith.constant 0 : index
      %c0_32 = arith.constant 0 : index
      %c0_33 = arith.constant 0 : index
      %45 = vector.load %arg6[%c0_31, %c0_32, %c0_33] : memref<1x8x16xf32, #tpu.memory_space<vmem>>, vector<1x8x16xf32>
      %46 = vector.shape_cast %45 : vector<1x8x16xf32> to vector<8x16xf32>
      %47 = vector.shape_cast %44 : vector<8x16xf32> to vector<1x8x16xf32>
      tpu.vector_store %arg6[%c0_31, %c0_32, %c0_33], %47 {strides = array<i32>} : memref<1x8x16xf32, #tpu.memory_space<vmem>>, vector<1x8x16xf32>,
    } else {
    }
    return
  }
  func.func @transform_0(%arg0: i32, %arg1: i32, %arg2: i32) -> (i32, i32, i32) {
    %c0_i32 = arith.constant 0 : i32
    %c0_i32_0 = arith.constant 0 : i32
    return %arg0, %arg1, %c0_i32 : i32, i32, i32
  }
  func.func @transform_1(%arg0: i32, %arg1: i32, %arg2: i32) -> (i32, i32, i32) {
    %c0_i32 = arith.constant 0 : i32
    %c0_i32_0 = arith.constant 0 : i32
    return %arg0, %arg2, %c0_i32 : i32, i32, i32
  }
  func.func @transform_2(%arg0: i32, %arg1: i32, %arg2: i32) -> (i32, i32, i32) {
    %c0_i32 = arith.constant 0 : i32
    %c0_i32_0 = arith.constant 0 : i32
    return %arg0, %arg2, %c0_i32 : i32, i32, i32
  }
  func.func @transform_3(%arg0: i32, %arg1: i32, %arg2: i32) -> (i32, i32, i32) {
    %c0_i32 = arith.constant 0 : i32
    %c0_i32_0 = arith.constant 0 : i32
    return %arg0, %arg1, %c0_i32 : i32, i32, i32
  }
}

module attributes {stable_mosaic.version = 11 : i64} {
  func.func @_matmul_kernel(%arg0: i32, %arg1: i32, %arg2: i32, %arg3: memref<16x64xf32, #tpu.memory_space<vmem>>, %arg4: memref<64x32xf32, #tpu.memory_space<vmem>>, %arg5: memref<1x32xf32, #tpu.memory_space<vmem>>, %arg6: memref<16x32xf32, #tpu.memory_space<vmem>>, %arg7: memref<16x32xf32, #tpu.memory_space<vmem>>, %arg8: memref<16x32xf32, #tpu.memory_space<vmem>>) attributes {dimension_semantics = [#tpu.dimension_semantics<parallel>, #tpu.dimension_semantics<parallel>, #tpu.dimension_semantics<arbitrary>], iteration_bounds = array<i64: 1, 1, 1>, scalar_prefetch = 0 : i64, scratch_operands = 1 : i64, tpu.core_type = #tpu.core_type<tc>, window_params = [{transform_indices = @transform_0, window_bounds = array<i64: 16, 64>}, {transform_indices = @transform_1, window_bounds = array<i64: 64, 32>}, {transform_indices = @transform_2, window_bounds = array<i64: 1, 32>}, {transform_indices = @transform_3, window_bounds = array<i64: 16, 32>}, {transform_indices = @transform_4, window_bounds = array<i64: 16, 32>}]} {
    %c0_i32 = arith.constant 0 : i32
    %0 = arith.cmpi eq, %arg2, %c0_i32 : i32
    %1 = arith.extui %0 : i1 to i32
    %c0_i32_0 = arith.constant 0 : i32
    %2 = arith.cmpi ne, %1, %c0_i32_0 : i32
    scf.if %2 {
      %cst_10 = arith.constant 0.000000e+00 : f32
      %14 = vector.broadcast %cst_10 : f32 to vector<16x32xf32>
      %c0_11 = arith.constant 0 : index
      %c0_12 = arith.constant 0 : index
      %15 = vector.load %arg8[%c0_11, %c0_12] : memref<16x32xf32, #tpu.memory_space<vmem>>, vector<16x32xf32>
      tpu.vector_store %arg8[%c0_11, %c0_12], %14 {strides = array<i32>} : memref<16x32xf32, #tpu.memory_space<vmem>>, vector<16x32xf32>,
    } else {
    }
    %c0 = arith.constant 0 : index
    %c0_1 = arith.constant 0 : index
    %3 = vector.load %arg3[%c0, %c0_1] : memref<16x64xf32, #tpu.memory_space<vmem>>, vector<16x64xf32>
    %c0_2 = arith.constant 0 : index
    %c0_3 = arith.constant 0 : index
    %4 = vector.load %arg8[%c0_2, %c0_3] : memref<16x32xf32, #tpu.memory_space<vmem>>, vector<16x32xf32>
    %5 = arith.truncf %3 : vector<16x64xf32> to vector<16x64xbf16>
    %c0_4 = arith.constant 0 : index
    %c0_5 = arith.constant 0 : index
    %6 = vector.load %arg4[%c0_4, %c0_5] : memref<64x32xf32, #tpu.memory_space<vmem>>, vector<64x32xf32>
    %7 = arith.truncf %6 : vector<64x32xf32> to vector<64x32xbf16>
    %cst = arith.constant dense<0.000000e+00> : vector<16x32xf32>
    %8 = tpu.matmul %5, %7, %cst {dimension_numbers = #tpu.dot_dimension_numbers<[1], [0], [0], [1], [0, 0, 1, 1], [], []>} : vector<16x64xbf16>, vector<64x32xbf16>, vector<16x32xf32> -> vector<16x32xf32>
    %9 = arith.addf %4, %8 : vector<16x32xf32>
    %c0_6 = arith.constant 0 : index
    %c0_7 = arith.constant 0 : index
    %10 = vector.load %arg8[%c0_6, %c0_7] : memref<16x32xf32, #tpu.memory_space<vmem>>, vector<16x32xf32>
    tpu.vector_store %arg8[%c0_6, %c0_7], %9 {strides = array<i32>} : memref<16x32xf32, #tpu.memory_space<vmem>>, vector<16x32xf32>,
    %c0_i32_8 = arith.constant 0 : i32
    %11 = arith.cmpi eq, %arg2, %c0_i32_8 : i32
    %12 = arith.extui %11 : i1 to i32
    %c0_i32_9 = arith.constant 0 : i32
    %13 = arith.cmpi ne, %12, %c0_i32_9 : i32
    scf.if %13 {
      %c0_10 = arith.constant 0 : index
      %c0_11 = arith.constant 0 : index
      %14 = vector.load %arg8[%c0_10, %c0_11] : memref<16x32xf32, #tpu.memory_space<vmem>>, vector<16x32xf32>
      %c0_12 = arith.constant 0 : index
      %c0_13 = arith.constant 0 : index
      %15 = vector.load %arg5[%c0_12, %c0_13] : memref<1x32xf32, #tpu.memory_space<vmem>>, vector<1x32xf32>
      %16 = vector.broadcast %15 : vector<1x32xf32> to vector<16x32xf32>
      %17 = arith.addf %14, %16 : vector<16x32xf32>
      %c0_14 = arith.constant 0 : index
      %c0_15 = arith.constant 0 : index
      %18 = vector.load %arg6[%c0_14, %c0_15] : memref<16x32xf32, #tpu.memory_space<vmem>>, vector<16x32xf32>
      %19 = arith.addf %17, %18 : vector<16x32xf32>
      %c0_16 = arith.constant 0 : index
      %c0_17 = arith.constant 0 : index
      %20 = vector.load %arg7[%c0_16, %c0_17] : memref<16x32xf32, #tpu.memory_space<vmem>>, vector<16x32xf32>
      tpu.vector_store %arg7[%c0_16, %c0_17], %19 {strides = array<i32>} : memref<16x32xf32, #tpu.memory_space<vmem>>, vector<16x32xf32>,
    } else {
    }
    return
  }
  func.func @transform_0(%arg0: i32, %arg1: i32, %arg2: i32) -> (i32, i32) {
    %c0_i32 = arith.constant 0 : i32
    return %arg0, %arg2 : i32, i32
  }
  func.func @transform_1(%arg0: i32, %arg1: i32, %arg2: i32) -> (i32, i32) {
    %c0_i32 = arith.constant 0 : i32
    return %arg2, %arg1 : i32, i32
  }
  func.func @transform_2(%arg0: i32, %arg1: i32, %arg2: i32) -> (i32, i32) {
    %c0_i32 = arith.constant 0 : i32
    %c0_i32_0 = arith.constant 0 : i32
    return %c0_i32, %arg1 : i32, i32
  }
  func.func @transform_3(%arg0: i32, %arg1: i32, %arg2: i32) -> (i32, i32) {
    %c0_i32 = arith.constant 0 : i32
    return %arg0, %arg1 : i32, i32
  }
  func.func @transform_4(%arg0: i32, %arg1: i32, %arg2: i32) -> (i32, i32) {
    %c0_i32 = arith.constant 0 : i32
    return %arg0, %arg1 : i32, i32
  }
}

module attributes {stable_mosaic.version = 11 : i64} {
  func.func @_matmul_kernel(%arg0: i32, %arg1: i32, %arg2: i32, %arg3: memref<16x32xf32, #tpu.memory_space<vmem>>, %arg4: memref<32x64xf32, #tpu.memory_space<vmem>>, %arg5: memref<1x32xf32, #tpu.memory_space<vmem>>, %arg6: memref<1x32xf32, #tpu.memory_space<vmem>>, %arg7: memref<1x64xf32, #tpu.memory_space<vmem>>, %arg8: memref<16x64xf32, #tpu.memory_space<vmem>>, %arg9: memref<16x64xf32, #tpu.memory_space<vmem>>) attributes {dimension_semantics = [#tpu.dimension_semantics<parallel>, #tpu.dimension_semantics<parallel>, #tpu.dimension_semantics<arbitrary>], iteration_bounds = array<i64: 1, 1, 1>, scalar_prefetch = 0 : i64, scratch_operands = 1 : i64, tpu.core_type = #tpu.core_type<tc>, window_params = [{transform_indices = @transform_0, window_bounds = array<i64: 16, 32>}, {transform_indices = @transform_1, window_bounds = array<i64: 32, 64>}, {pipeline_mode = #tpu.pipeline_mode<synchronous>, transform_indices = @transform_2, window_bounds = array<i64: 1, 32>}, {pipeline_mode = #tpu.pipeline_mode<synchronous>, transform_indices = @transform_3, window_bounds = array<i64: 1, 32>}, {transform_indices = @transform_4, window_bounds = array<i64: 1, 64>}, {transform_indices = @transform_5, window_bounds = array<i64: 16, 64>}]} {
    %c0_i32 = arith.constant 0 : i32
    %0 = arith.cmpi eq, %arg2, %c0_i32 : i32
    %1 = arith.extui %0 : i1 to i32
    %c0_i32_0 = arith.constant 0 : i32
    %2 = arith.cmpi ne, %1, %c0_i32_0 : i32
    scf.if %2 {
      %cst_19 = arith.constant 0.000000e+00 : f32
      %36 = vector.broadcast %cst_19 : f32 to vector<16x64xf32>
      %c0_20 = arith.constant 0 : index
      %c0_21 = arith.constant 0 : index
      %37 = vector.load %arg9[%c0_20, %c0_21] : memref<16x64xf32, #tpu.memory_space<vmem>>, vector<16x64xf32>
      tpu.vector_store %arg9[%c0_20, %c0_21], %36 {strides = array<i32>} : memref<16x64xf32, #tpu.memory_space<vmem>>, vector<16x64xf32>,
    } else {
    }
    %c0 = arith.constant 0 : index
    %c0_1 = arith.constant 0 : index
    %3 = vector.load %arg3[%c0, %c0_1] : memref<16x32xf32, #tpu.memory_space<vmem>>, vector<16x32xf32>
    %cst = arith.constant dense<0.000000e+00> : vector<16xf32>
    %4 = vector.multi_reduction <add>, %3, %cst [1] : vector<16x32xf32> to vector<16xf32>
    %5 = vector.shape_cast %4 : vector<16xf32> to vector<16x1xf32>
    %cst_2 = arith.constant 3.200000e+01 : f32
    %6 = vector.broadcast %cst_2 : f32 to vector<16x1xf32>
    %7 = arith.divf %5, %6 : vector<16x1xf32>
    %8 = vector.broadcast %7 : vector<16x1xf32> to vector<16x32xf32>
    %9 = arith.subf %3, %8 : vector<16x32xf32>
    %10 = arith.mulf %9, %9 : vector<16x32xf32>
    %cst_3 = arith.constant dense<0.000000e+00> : vector<16xf32>
    %11 = vector.multi_reduction <add>, %10, %cst_3 [1] : vector<16x32xf32> to vector<16xf32>
    %12 = vector.shape_cast %11 : vector<16xf32> to vector<16x1xf32>
    %cst_4 = arith.constant 3.200000e+01 : f32
    %13 = vector.broadcast %cst_4 : f32 to vector<16x1xf32>
    %14 = arith.divf %12, %13 : vector<16x1xf32>
    %cst_5 = arith.constant 9.99999974E-6 : f32
    %15 = vector.broadcast %cst_5 : f32 to vector<16x1xf32>
    %16 = arith.addf %14, %15 : vector<16x1xf32>
    %17 = math.rsqrt %16 : vector<16x1xf32>
    %18 = vector.broadcast %17 : vector<16x1xf32> to vector<16x32xf32>
    %19 = arith.mulf %9, %18 : vector<16x32xf32>
    %c0_6 = arith.constant 0 : index
    %c0_7 = arith.constant 0 : index
    %20 = vector.load %arg5[%c0_6, %c0_7] : memref<1x32xf32, #tpu.memory_space<vmem>>, vector<1x32xf32>
    %21 = vector.broadcast %20 : vector<1x32xf32> to vector<16x32xf32>
    %22 = arith.mulf %19, %21 : vector<16x32xf32>
    %c0_8 = arith.constant 0 : index
    %c0_9 = arith.constant 0 : index
    %23 = vector.load %arg6[%c0_8, %c0_9] : memref<1x32xf32, #tpu.memory_space<vmem>>, vector<1x32xf32>
    %24 = vector.broadcast %23 : vector<1x32xf32> to vector<16x32xf32>
    %25 = arith.addf %22, %24 : vector<16x32xf32>
    %c0_10 = arith.constant 0 : index
    %c0_11 = arith.constant 0 : index
    %26 = vector.load %arg9[%c0_10, %c0_11] : memref<16x64xf32, #tpu.memory_space<vmem>>, vector<16x64xf32>
    %27 = arith.truncf %25 : vector<16x32xf32> to vector<16x32xbf16>
    %c0_12 = arith.constant 0 : index
    %c0_13 = arith.constant 0 : index
    %28 = vector.load %arg4[%c0_12, %c0_13] : memref<32x64xf32, #tpu.memory_space<vmem>>, vector<32x64xf32>
    %29 = arith.truncf %28 : vector<32x64xf32> to vector<32x64xbf16>
    %cst_14 = arith.constant dense<0.000000e+00> : vector<16x64xf32>
    %30 = tpu.matmul %27, %29, %cst_14 {dimension_numbers = #tpu.dot_dimension_numbers<[1], [0], [0], [1], [0, 0, 1, 1], [], []>} : vector<16x32xbf16>, vector<32x64xbf16>, vector<16x64xf32> -> vector<16x64xf32>
    %31 = arith.addf %26, %30 : vector<16x64xf32>
    %c0_15 = arith.constant 0 : index
    %c0_16 = arith.constant 0 : index
    %32 = vector.load %arg9[%c0_15, %c0_16] : memref<16x64xf32, #tpu.memory_space<vmem>>, vector<16x64xf32>
    tpu.vector_store %arg9[%c0_15, %c0_16], %31 {strides = array<i32>} : memref<16x64xf32, #tpu.memory_space<vmem>>, vector<16x64xf32>,
    %c0_i32_17 = arith.constant 0 : i32
    %33 = arith.cmpi eq, %arg2, %c0_i32_17 : i32
    %34 = arith.extui %33 : i1 to i32
    %c0_i32_18 = arith.constant 0 : i32
    %35 = arith.cmpi ne, %34, %c0_i32_18 : i32
    scf.if %35 {
      %c0_19 = arith.constant 0 : index
      %c0_20 = arith.constant 0 : index
      %36 = vector.load %arg9[%c0_19, %c0_20] : memref<16x64xf32, #tpu.memory_space<vmem>>, vector<16x64xf32>
      %c0_21 = arith.constant 0 : index
      %c0_22 = arith.constant 0 : index
      %37 = vector.load %arg7[%c0_21, %c0_22] : memref<1x64xf32, #tpu.memory_space<vmem>>, vector<1x64xf32>
      %38 = vector.broadcast %37 : vector<1x64xf32> to vector<16x64xf32>
      %39 = arith.addf %36, %38 : vector<16x64xf32>
      %40 = arith.mulf %39, %39 : vector<16x64xf32>
      %41 = arith.mulf %39, %40 : vector<16x64xf32>
      %cst_23 = arith.constant 4.471500e-02 : f32
      %42 = vector.broadcast %cst_23 : f32 to vector<16x64xf32>
      %43 = arith.mulf %42, %41 : vector<16x64xf32>
      %44 = arith.addf %39, %43 : vector<16x64xf32>
      %cst_24 = arith.constant 0.797884583 : f32
      %45 = vector.broadcast %cst_24 : f32 to vector<16x64xf32>
      %46 = arith.mulf %45, %44 : vector<16x64xf32>
      %47 = math.tanh %46 : vector<16x64xf32>
      %cst_25 = arith.constant 1.000000e+00 : f32
      %48 = vector.broadcast %cst_25 : f32 to vector<16x64xf32>
      %49 = arith.addf %48, %47 : vector<16x64xf32>
      %cst_26 = arith.constant 5.000000e-01 : f32
      %50 = vector.broadcast %cst_26 : f32 to vector<16x64xf32>
      %51 = arith.mulf %50, %49 : vector<16x64xf32>
      %52 = arith.mulf %39, %51 : vector<16x64xf32>
      %c0_27 = arith.constant 0 : index
      %c0_28 = arith.constant 0 : index
      %53 = vector.load %arg8[%c0_27, %c0_28] : memref<16x64xf32, #tpu.memory_space<vmem>>, vector<16x64xf32>
      tpu.vector_store %arg8[%c0_27, %c0_28], %52 {strides = array<i32>} : memref<16x64xf32, #tpu.memory_space<vmem>>, vector<16x64xf32>,
    } else {
    }
    return
  }
  func.func @transform_0(%arg0: i32, %arg1: i32, %arg2: i32) -> (i32, i32) {
    %c0_i32 = arith.constant 0 : i32
    return %arg0, %arg2 : i32, i32
  }
  func.func @transform_1(%arg0: i32, %arg1: i32, %arg2: i32) -> (i32, i32) {
    %c0_i32 = arith.constant 0 : i32
    return %arg2, %arg1 : i32, i32
  }
  func.func @transform_2(%arg0: i32, %arg1: i32, %arg2: i32) -> (i32, i32) {
    %c0_i32 = arith.constant 0 : i32
    %c0_i32_0 = arith.constant 0 : i32
    %c0_i32_1 = arith.constant 0 : i32
    return %c0_i32, %c0_i32_0 : i32, i32
  }
  func.func @transform_3(%arg0: i32, %arg1: i32, %arg2: i32) -> (i32, i32) {
    %c0_i32 = arith.constant 0 : i32
    %c0_i32_0 = arith.constant 0 : i32
    %c0_i32_1 = arith.constant 0 : i32
    return %c0_i32, %c0_i32_0 : i32, i32
  }
  func.func @transform_4(%arg0: i32, %arg1: i32, %arg2: i32) -> (i32, i32) {
    %c0_i32 = arith.constant 0 : i32
    %c0_i32_0 = arith.constant 0 : i32
    return %c0_i32, %arg1 : i32, i32
  }
  func.func @transform_5(%arg0: i32, %arg1: i32, %arg2: i32) -> (i32, i32) {
    %c0_i32 = arith.constant 0 : i32
    return %arg0, %arg1 : i32, i32
  }
}

module attributes {stable_mosaic.version = 11 : i64} {
  func.func @_matmul_kernel(%arg0: i32, %arg1: i32, %arg2: i32, %arg3: memref<16x32xf32, #tpu.memory_space<vmem>>, %arg4: memref<32x192xf32, #tpu.memory_space<vmem>>, %arg5: memref<1x32xf32, #tpu.memory_space<vmem>>, %arg6: memref<1x32xf32, #tpu.memory_space<vmem>>, %arg7: memref<16x192xf32, #tpu.memory_space<vmem>>, %arg8: memref<16x192xf32, #tpu.memory_space<vmem>>) attributes {dimension_semantics = [#tpu.dimension_semantics<parallel>, #tpu.dimension_semantics<parallel>, #tpu.dimension_semantics<arbitrary>], iteration_bounds = array<i64: 1, 1, 1>, scalar_prefetch = 0 : i64, scratch_operands = 1 : i64, tpu.core_type = #tpu.core_type<tc>, window_params = [{transform_indices = @transform_0, window_bounds = array<i64: 16, 32>}, {transform_indices = @transform_1, window_bounds = array<i64: 32, 192>}, {pipeline_mode = #tpu.pipeline_mode<synchronous>, transform_indices = @transform_2, window_bounds = array<i64: 1, 32>}, {pipeline_mode = #tpu.pipeline_mode<synchronous>, transform_indices = @transform_3, window_bounds = array<i64: 1, 32>}, {transform_indices = @transform_4, window_bounds = array<i64: 16, 192>}]} {
    %c0_i32 = arith.constant 0 : i32
    %0 = arith.cmpi eq, %arg2, %c0_i32 : i32
    %1 = arith.extui %0 : i1 to i32
    %c0_i32_0 = arith.constant 0 : i32
    %2 = arith.cmpi ne, %1, %c0_i32_0 : i32
    scf.if %2 {
      %cst_19 = arith.constant 0.000000e+00 : f32
      %36 = vector.broadcast %cst_19 : f32 to vector<16x192xf32>
      %c0_20 = arith.constant 0 : index
      %c0_21 = arith.constant 0 : index
      %37 = vector.load %arg8[%c0_20, %c0_21] : memref<16x192xf32, #tpu.memory_space<vmem>>, vector<16x192xf32>
      tpu.vector_store %arg8[%c0_20, %c0_21], %36 {strides = array<i32>} : memref<16x192xf32, #tpu.memory_space<vmem>>, vector<16x192xf32>,
    } else {
    }
    %c0 = arith.constant 0 : index
    %c0_1 = arith.constant 0 : index
    %3 = vector.load %arg3[%c0, %c0_1] : memref<16x32xf32, #tpu.memory_space<vmem>>, vector<16x32xf32>
    %cst = arith.constant dense<0.000000e+00> : vector<16xf32>
    %4 = vector.multi_reduction <add>, %3, %cst [1] : vector<16x32xf32> to vector<16xf32>
    %5 = vector.shape_cast %4 : vector<16xf32> to vector<16x1xf32>
    %cst_2 = arith.constant 3.200000e+01 : f32
    %6 = vector.broadcast %cst_2 : f32 to vector<16x1xf32>
    %7 = arith.divf %5, %6 : vector<16x1xf32>
    %8 = vector.broadcast %7 : vector<16x1xf32> to vector<16x32xf32>
    %9 = arith.subf %3, %8 : vector<16x32xf32>
    %10 = arith.mulf %9, %9 : vector<16x32xf32>
    %cst_3 = arith.constant dense<0.000000e+00> : vector<16xf32>
    %11 = vector.multi_reduction <add>, %10, %cst_3 [1] : vector<16x32xf32> to vector<16xf32>
    %12 = vector.shape_cast %11 : vector<16xf32> to vector<16x1xf32>
    %cst_4 = arith.constant 3.200000e+01 : f32
    %13 = vector.broadcast %cst_4 : f32 to vector<16x1xf32>
    %14 = arith.divf %12, %13 : vector<16x1xf32>
    %cst_5 = arith.constant 9.99999974E-6 : f32
    %15 = vector.broadcast %cst_5 : f32 to vector<16x1xf32>
    %16 = arith.addf %14, %15 : vector<16x1xf32>
    %17 = math.rsqrt %16 : vector<16x1xf32>
    %18 = vector.broadcast %17 : vector<16x1xf32> to vector<16x32xf32>
    %19 = arith.mulf %9, %18 : vector<16x32xf32>
    %c0_6 = arith.constant 0 : index
    %c0_7 = arith.constant 0 : index
    %20 = vector.load %arg5[%c0_6, %c0_7] : memref<1x32xf32, #tpu.memory_space<vmem>>, vector<1x32xf32>
    %21 = vector.broadcast %20 : vector<1x32xf32> to vector<16x32xf32>
    %22 = arith.mulf %19, %21 : vector<16x32xf32>
    %c0_8 = arith.constant 0 : index
    %c0_9 = arith.constant 0 : index
    %23 = vector.load %arg6[%c0_8, %c0_9] : memref<1x32xf32, #tpu.memory_space<vmem>>, vector<1x32xf32>
    %24 = vector.broadcast %23 : vector<1x32xf32> to vector<16x32xf32>
    %25 = arith.addf %22, %24 : vector<16x32xf32>
    %c0_10 = arith.constant 0 : index
    %c0_11 = arith.constant 0 : index
    %26 = vector.load %arg8[%c0_10, %c0_11] : memref<16x192xf32, #tpu.memory_space<vmem>>, vector<16x192xf32>
    %27 = arith.truncf %25 : vector<16x32xf32> to vector<16x32xbf16>
    %c0_12 = arith.constant 0 : index
    %c0_13 = arith.constant 0 : index
    %28 = vector.load %arg4[%c0_12, %c0_13] : memref<32x192xf32, #tpu.memory_space<vmem>>, vector<32x192xf32>
    %29 = arith.truncf %28 : vector<32x192xf32> to vector<32x192xbf16>
    %cst_14 = arith.constant dense<0.000000e+00> : vector<16x192xf32>
    %30 = tpu.matmul %27, %29, %cst_14 {dimension_numbers = #tpu.dot_dimension_numbers<[1], [0], [0], [1], [0, 0, 1, 1], [], []>} : vector<16x32xbf16>, vector<32x192xbf16>, vector<16x192xf32> -> vector<16x192xf32>
    %31 = arith.addf %26, %30 : vector<16x192xf32>
    %c0_15 = arith.constant 0 : index
    %c0_16 = arith.constant 0 : index
    %32 = vector.load %arg8[%c0_15, %c0_16] : memref<16x192xf32, #tpu.memory_space<vmem>>, vector<16x192xf32>
    tpu.vector_store %arg8[%c0_15, %c0_16], %31 {strides = array<i32>} : memref<16x192xf32, #tpu.memory_space<vmem>>, vector<16x192xf32>,
    %c0_i32_17 = arith.constant 0 : i32
    %33 = arith.cmpi eq, %arg2, %c0_i32_17 : i32
    %34 = arith.extui %33 : i1 to i32
    %c0_i32_18 = arith.constant 0 : i32
    %35 = arith.cmpi ne, %34, %c0_i32_18 : i32
    scf.if %35 {
      %c0_19 = arith.constant 0 : index
      %c0_20 = arith.constant 0 : index
      %36 = vector.load %arg8[%c0_19, %c0_20] : memref<16x192xf32, #tpu.memory_space<vmem>>, vector<16x192xf32>
      %c0_21 = arith.constant 0 : index
      %c0_22 = arith.constant 0 : index
      %37 = vector.load %arg7[%c0_21, %c0_22] : memref<16x192xf32, #tpu.memory_space<vmem>>, vector<16x192xf32>
      tpu.vector_store %arg7[%c0_21, %c0_22], %36 {strides = array<i32>} : memref<16x192xf32, #tpu.memory_space<vmem>>, vector<16x192xf32>,
    } else {
    }
    return
  }
  func.func @transform_0(%arg0: i32, %arg1: i32, %arg2: i32) -> (i32, i32) {
    %c0_i32 = arith.constant 0 : i32
    return %arg0, %arg2 : i32, i32
  }
  func.func @transform_1(%arg0: i32, %arg1: i32, %arg2: i32) -> (i32, i32) {
    %c0_i32 = arith.constant 0 : i32
    return %arg2, %arg1 : i32, i32
  }
  func.func @transform_2(%arg0: i32, %arg1: i32, %arg2: i32) -> (i32, i32) {
    %c0_i32 = arith.constant 0 : i32
    %c0_i32_0 = arith.constant 0 : i32
    %c0_i32_1 = arith.constant 0 : i32
    return %c0_i32, %c0_i32_0 : i32, i32
  }
  func.func @transform_3(%arg0: i32, %arg1: i32, %arg2: i32) -> (i32, i32) {
    %c0_i32 = arith.constant 0 : i32
    %c0_i32_0 = arith.constant 0 : i32
    %c0_i32_1 = arith.constant 0 : i32
    return %c0_i32, %c0_i32_0 : i32, i32
  }
  func.func @transform_4(%arg0: i32, %arg1: i32, %arg2: i32) -> (i32, i32) {
    %c0_i32 = arith.constant 0 : i32
    return %arg0, %arg1 : i32, i32
  }
}

module attributes {stable_mosaic.version = 11 : i64} {
  func.func @_matmul_kernel(%arg0: i32, %arg1: i32, %arg2: i32, %arg3: memref<16x64xf32, #tpu.memory_space<vmem>>, %arg4: memref<64x32xf32, #tpu.memory_space<vmem>>, %arg5: memref<1x32xf32, #tpu.memory_space<vmem>>, %arg6: memref<16x32xf32, #tpu.memory_space<vmem>>, %arg7: memref<16x32xf32, #tpu.memory_space<vmem>>, %arg8: memref<16x32xf32, #tpu.memory_space<vmem>>) attributes {dimension_semantics = [#tpu.dimension_semantics<parallel>, #tpu.dimension_semantics<parallel>, #tpu.dimension_semantics<arbitrary>], iteration_bounds = array<i64: 1, 1, 1>, scalar_prefetch = 0 : i64, scratch_operands = 1 : i64, tpu.core_type = #tpu.core_type<tc>, window_params = [{transform_indices = @transform_0, window_bounds = array<i64: 16, 64>}, {transform_indices = @transform_1, window_bounds = array<i64: 64, 32>}, {transform_indices = @transform_2, window_bounds = array<i64: 1, 32>}, {transform_indices = @transform_3, window_bounds = array<i64: 16, 32>}, {transform_indices = @transform_4, window_bounds = array<i64: 16, 32>}]} {
    %c0_i32 = arith.constant 0 : i32
    %0 = arith.cmpi eq, %arg2, %c0_i32 : i32
    %1 = arith.extui %0 : i1 to i32
    %c0_i32_0 = arith.constant 0 : i32
    %2 = arith.cmpi ne, %1, %c0_i32_0 : i32
    scf.if %2 {
      %cst_10 = arith.constant 0.000000e+00 : f32
      %14 = vector.broadcast %cst_10 : f32 to vector<16x32xf32>
      %c0_11 = arith.constant 0 : index
      %c0_12 = arith.constant 0 : index
      %15 = vector.load %arg8[%c0_11, %c0_12] : memref<16x32xf32, #tpu.memory_space<vmem>>, vector<16x32xf32>
      tpu.vector_store %arg8[%c0_11, %c0_12], %14 {strides = array<i32>} : memref<16x32xf32, #tpu.memory_space<vmem>>, vector<16x32xf32>,
    } else {
    }
    %c0 = arith.constant 0 : index
    %c0_1 = arith.constant 0 : index
    %3 = vector.load %arg3[%c0, %c0_1] : memref<16x64xf32, #tpu.memory_space<vmem>>, vector<16x64xf32>
    %c0_2 = arith.constant 0 : index
    %c0_3 = arith.constant 0 : index
    %4 = vector.load %arg8[%c0_2, %c0_3] : memref<16x32xf32, #tpu.memory_space<vmem>>, vector<16x32xf32>
    %5 = arith.truncf %3 : vector<16x64xf32> to vector<16x64xbf16>
    %c0_4 = arith.constant 0 : index
    %c0_5 = arith.constant 0 : index
    %6 = vector.load %arg4[%c0_4, %c0_5] : memref<64x32xf32, #tpu.memory_space<vmem>>, vector<64x32xf32>
    %7 = arith.truncf %6 : vector<64x32xf32> to vector<64x32xbf16>
    %cst = arith.constant dense<0.000000e+00> : vector<16x32xf32>
    %8 = tpu.matmul %5, %7, %cst {dimension_numbers = #tpu.dot_dimension_numbers<[1], [0], [0], [1], [0, 0, 1, 1], [], []>} : vector<16x64xbf16>, vector<64x32xbf16>, vector<16x32xf32> -> vector<16x32xf32>
    %9 = arith.addf %4, %8 : vector<16x32xf32>
    %c0_6 = arith.constant 0 : index
    %c0_7 = arith.constant 0 : index
    %10 = vector.load %arg8[%c0_6, %c0_7] : memref<16x32xf32, #tpu.memory_space<vmem>>, vector<16x32xf32>
    tpu.vector_store %arg8[%c0_6, %c0_7], %9 {strides = array<i32>} : memref<16x32xf32, #tpu.memory_space<vmem>>, vector<16x32xf32>,
    %c0_i32_8 = arith.constant 0 : i32
    %11 = arith.cmpi eq, %arg2, %c0_i32_8 : i32
    %12 = arith.extui %11 : i1 to i32
    %c0_i32_9 = arith.constant 0 : i32
    %13 = arith.cmpi ne, %12, %c0_i32_9 : i32
    scf.if %13 {
      %c0_10 = arith.constant 0 : index
      %c0_11 = arith.constant 0 : index
      %14 = vector.load %arg8[%c0_10, %c0_11] : memref<16x32xf32, #tpu.memory_space<vmem>>, vector<16x32xf32>
      %c0_12 = arith.constant 0 : index
      %c0_13 = arith.constant 0 : index
      %15 = vector.load %arg5[%c0_12, %c0_13] : memref<1x32xf32, #tpu.memory_space<vmem>>, vector<1x32xf32>
      %16 = vector.broadcast %15 : vector<1x32xf32> to vector<16x32xf32>
      %17 = arith.addf %14, %16 : vector<16x32xf32>
      %c0_14 = arith.constant 0 : index
      %c0_15 = arith.constant 0 : index
      %18 = vector.load %arg6[%c0_14, %c0_15] : memref<16x32xf32, #tpu.memory_space<vmem>>, vector<16x32xf32>
      %19 = arith.addf %17, %18 : vector<16x32xf32>
      %c0_16 = arith.constant 0 : index
      %c0_17 = arith.constant 0 : index
      %20 = vector.load %arg7[%c0_16, %c0_17] : memref<16x32xf32, #tpu.memory_space<vmem>>, vector<16x32xf32>
      tpu.vector_store %arg7[%c0_16, %c0_17], %19 {strides = array<i32>} : memref<16x32xf32, #tpu.memory_space<vmem>>, vector<16x32xf32>,
    } else {
    }
    return
  }
  func.func @transform_0(%arg0: i32, %arg1: i32, %arg2: i32) -> (i32, i32) {
    %c0_i32 = arith.constant 0 : i32
    return %arg0, %arg2 : i32, i32
  }
  func.func @transform_1(%arg0: i32, %arg1: i32, %arg2: i32) -> (i32, i32) {
    %c0_i32 = arith.constant 0 : i32
    return %arg2, %arg1 : i32, i32
  }
  func.func @transform_2(%arg0: i32, %arg1: i32, %arg2: i32) -> (i32, i32) {
    %c0_i32 = arith.constant 0 : i32
    %c0_i32_0 = arith.constant 0 : i32
    return %c0_i32, %arg1 : i32, i32
  }
  func.func @transform_3(%arg0: i32, %arg1: i32, %arg2: i32) -> (i32, i32) {
    %c0_i32 = arith.constant 0 : i32
    return %arg0, %arg1 : i32, i32
  }
  func.func @transform_4(%arg0: i32, %arg1: i32, %arg2: i32) -> (i32, i32) {
    %c0_i32 = arith.constant 0 : i32
    return %arg0, %arg1 : i32, i32
  }
}

</mosaic_0001>

<llo_original>
// kernel: transformer_forward.10
$region0: #{transformer_forward.10}
  #allocation0 [shape = 'u32[]', space=smem, size = 0x4, offset = 0x4, fixed_abs, tag = 'smem constant byte address 0x4 - core index']
  #allocation1 [shape = 'u32[72,128]{1,0:T(1,128)}', space=vmem, size = 0x9000, scoped, tag = 'internal scratch']
  #allocation2 [shape = 'f32[16,192]{1,0:T(8,128)}', space=vmem, size = 0x4000, scoped, tag = 'scratch operand']
  %s0 = inlined_call_operand.vmem [shape: f32[16,32], index: 0, kind: input, shape index: {}]
  %s1 = inlined_call_operand.hbm [shape: f32[32,192], index: 1, kind: input, shape index: {}]
  %s2 = inlined_call_operand.vmem [shape: f32[1,32], index: 2, kind: input, shape index: {}]
  %s3 = inlined_call_operand.vmem [shape: f32[1,32], index: 3, kind: input, shape index: {}]
  %s4 = inlined_call_operand.vmem [shape: f32[16,192], index: 4, kind: output, shape index: {}]
  %s5 = sld [smem:[#allocation0]]
  $region38: #{transformer_forward.10} parent=0
    _
  %s7 = ssub.s32 1, %s5
  %s8 = scalar_select 0, %s7, %s5
  $region1: #{transformer_forward.10} parent=0
    #allocation3 [shape = 'u8[32768]{0}', space=vmem, size = 0x8000, scoped, tag = 'input window, operand 1, single buffered']
    #allocation4 [shape = 's32[1]{0}', space=sflag, size = 0x4, scoped, tag = 'scoped memory for transformer_forward.10']
    %9 = vsyncpa [#allocation4], 0
    // Predicated region
    $region2: #{transformer_forward.10} parent=1 // pred_check
      _
    $region3: #{transformer_forward.10} parent=1 // pred_check_branch
      %11 = sbr.rel (0) target = $region5
    $region4: #{transformer_forward.10} parent=1 // pred_region
      _
    $region5: #{transformer_forward.10} parent=1 // pred_fallthru
      _
    // Predicated region
    $region6: #{transformer_forward.10} parent=1 // pred_check
      _
    $region7: #{transformer_forward.10} parent=1 // pred_check_branch
      %13 = sbr.rel (0) target = $region9
    $region8: #{transformer_forward.10} parent=1 // pred_region
      %15 = vsyncadd [#allocation4], 0
      %s16 = sshll.u32 %s1, 4
      %s17 = int_to_ptr.hbm [resolvable:$true] %s16
      %s18 = sshll.u32 [#allocation3], 4
      %s19 = int_to_ptr.vmem [resolvable:$true] %s18
      %24 = dma.hbm_to_vmem [thread:$0]  %s17, 1024, %s19, [#allocation4], 256, 256, 16
    $region9: #{transformer_forward.10} parent=1 // pred_fallthru
      _
    // Predicated region
    $region10: #{transformer_forward.10} parent=1 // pred_check
      _
    $region11: #{transformer_forward.10} parent=1 // pred_check_branch
      %26 = sbr.rel (0) target = $region13
    $region12: #{transformer_forward.10} parent=1 // pred_region
      _
    $region13: #{transformer_forward.10} parent=1 // pred_fallthru
      _
    // Predicated region
    $region14: #{transformer_forward.10} parent=1 // pred_check
      _
    $region15: #{transformer_forward.10} parent=1 // pred_check_branch
      %28 = sbr.rel (0) target = $region17
    $region16: #{transformer_forward.10} parent=1 // pred_region
      _
    $region17: #{transformer_forward.10} parent=1 // pred_fallthru
      _
    // Predicated region
    $region18: #{transformer_forward.10} parent=1 // pred_check
      _
    $region19: #{transformer_forward.10} parent=1 // pred_check_branch
      %30 = sbr.rel (0) target = $region21
    $region20: #{transformer_forward.10} parent=1 // pred_region
      %32 = dma.done [#allocation4], 1024
    $region21: #{transformer_forward.10} parent=1 // pred_fallthru
      _
    %p34 = scmp.eq.s32.totalorder 0, 0
    // Predicated region
    $region22: #{transformer_forward.10} parent=1 // pred_check
      %p35 = pneg %p34
    $region23: #{transformer_forward.10} parent=1 // pred_check_branch
      %37 = sbr.rel (%p35) target = $region25
    $region24: #{transformer_forward.10} parent=1 // pred_region
      %38 = vst [vmem:[#allocation2] sm:$0xff] 0.0
      %vm39 = vcmask 523264
      %40 = vst.msk [vmem:[#allocation2 + $0x8] sm:$0xff] %vm39, 0.0
      %41 = vst [vmem:[#allocation2 + $0x10] sm:$0xff] 0.0
      %42 = vst.msk [vmem:[#allocation2 + $0x18] sm:$0xff] %vm39, 0.0
    $region25: #{transformer_forward.10} parent=1 // pred_fallthru
      _
    %v43 = vld [vmem:[%s0] sm:$0xff]
    %v44 = vld [vmem:[%s0 + $0x8] sm:$0xff]
    %vm45 = vcmask 261120
    %v46 = vsel %vm45, %v43, 0.0
    %47 = vadd.xlane.f32.xlu0 %v46
    %v48 = vpop.xlane.xlu0 %47
    %v49 = vsel %vm45, %v44, 0.0
    %50 = vadd.xlane.f32.xlu0 %v49
    %v51 = vpop.xlane.xlu0 %50
    %v52 = vrcp.pop 32.0
    %v53 = vmul.f32 32.0, %v52
    %v54 = vsub.f32 1.0, %v53
    %v55 = vmul.f32 %v52, %v54
    %v56 = vadd.f32 %v52, %v55
    %vm57 = vweird.f32 %v52
    %v58 = vsel %vm57, %v52, %v56
    %v59 = vmul.f32 %v48, %v58
    %v60 = vmul.f32 %v51, %v58
    %v61 = vsub.f32 %v43, %v59
    %v62 = vsub.f32 %v44, %v60
    %v63 = vmul.f32 %v61, %v61
    %v64 = vmul.f32 %v62, %v62
    %v65 = vsel %vm45, %v63, 0.0
    %66 = vadd.xlane.f32.xlu0 %v65
    %v67 = vpop.xlane.xlu0 %66
    %v68 = vsel %vm45, %v64, 0.0
    %69 = vadd.xlane.f32.xlu0 %v68
    %v70 = vpop.xlane.xlu0 %69
    %v71 = vmul.f32 %v67, %v58
    %v72 = vmul.f32 %v70, %v58
    %v73 = vadd.f32 %v71, 1e-05
    %v74 = vadd.f32 %v72, 1e-05
    %v75 = vrsqrt.pop %v73
    %v76 = vmul.f32 %v75, %v73
    %v77 = vmul.f32 %v76, %v75
    %v78 = vmul.f32 0.5, %v77
    %v79 = vsub.f32 1.5, %v78
    %v80 = vmul.f32 %v75, %v79
    %vm81 = vweird.f32 %v73
    %vm82 = vweird.f32 %v75
    %vm83 = vmor %vm81, %vm82
    %v84 = vsel %vm83, %v75, %v80
    %v85 = vrsqrt.pop %v74
    %v86 = vmul.f32 %v85, %v74
    %v87 = vmul.f32 %v86, %v85
    %v88 = vmul.f32 0.5, %v87
    %v89 = vsub.f32 1.5, %v88
    %v90 = vmul.f32 %v85, %v89
    %vm91 = vweird.f32 %v74
    %vm92 = vweird.f32 %v85
    %vm93 = vmor %vm91, %vm92
    %v94 = vsel %vm93, %v85, %v90
    %v95 = vmul.f32 %v61, %v84
    %v96 = vmul.f32 %v62, %v94
    %v97 = vld [vmem:[%s2] sm:$0x1]
    %v99 = vperm.slane %v97, 0
    %v101 = vmul.f32 %v95, %v99
    %v102 = vmul.f32 %v96, %v99
    %v103 = vld [vmem:[%s3] sm:$0x1]
    %v105 = vperm.slane %v103, 0
    %v107 = vadd.f32 %v101, %v105
    %v108 = vadd.f32 %v102, %v105
    %v109 = vld [vmem:[#allocation2] sm:$0xff]
    %v110 = vld [vmem:[#allocation2 + $0x8] sm:$0xff]
    %v111 = vld [vmem:[#allocation2 + $0x10] sm:$0xff]
    %v112 = vld [vmem:[#allocation2 + $0x18] sm:$0xff]
    %v113 = vpack.c.bf16 %v108, %v107
    %v114 = vld [vmem:[#allocation3] sm:$0xff]
    %v115 = vld [vmem:[#allocation3 + $0x8] sm:$0xff]
    %v116 = vld [vmem:[#allocation3 + $0x10] sm:$0xff]
    %v117 = vld [vmem:[#allocation3 + $0x18] sm:$0xff]
    %v118 = vld [vmem:[#allocation3 + $0x20] sm:$0xff]
    %v119 = vld [vmem:[#allocation3 + $0x28] sm:$0xff]
    %v120 = vld [vmem:[#allocation3 + $0x30] sm:$0xff]
    %v121 = vld [vmem:[#allocation3 + $0x38] sm:$0xff]
    %v122 = vpack.c.bf16 %v116, %v114
    %v123 = vpack.c.bf16 %v117, %v115
    %v124 = vpack.c.bf16 %v120, %v118
    %v125 = vpack.c.bf16 %v121, %v119
    %v127 = vsel %vm45, %v113, 0
    %129 = vmatpush.bf16.msra.mxu0 0
    %130 = vmatpush.bf16.msra.mxu0 0
    %131 = vmatpush.bf16.msra.mxu0 0
    %132 = vmatpush.bf16.msra.mxu0 0
    %133 = vmatpush.bf16.msra.mxu0 0
    %134 = vmatpush.bf16.msra.mxu0 0
    %135 = vmatpush.bf16.msra.mxu0 %v124
    %136 = vmatpush.bf16.msra.mxu0 %v122
    %137 = vmatmul.bf16.gmra.mxu0 %v127
    %v138 = vpop.f32.mrf.mxu0
    %v139 = vadd.f32 0.0, %v138
    %v140 = vpop.f32.mrf.mxu0
    %v141 = vadd.f32 0.0, %v140
    %142 = vdwg.mxu0
    %143 = vmatpush.bf16.msra.mxu0 0
    %144 = vmatpush.bf16.msra.mxu0 0
    %145 = vmatpush.bf16.msra.mxu0 0
    %146 = vmatpush.bf16.msra.mxu0 0
    %147 = vmatpush.bf16.msra.mxu0 0
    %148 = vmatpush.bf16.msra.mxu0 0
    %149 = vmatpush.bf16.msra.mxu0 %v125
    %150 = vmatpush.bf16.msra.mxu0 %v123
    %151 = vmatmul.bf16.gmra.mxu0 %v127
    %v152 = vpop.f32.mrf.mxu0
    %v153 = vadd.f32 0.0, %v152
    %v154 = vpop.f32.mrf.mxu0
    %v155 = vadd.f32 0.0, %v154
    %156 = vdwg.mxu0
    %v157 = vadd.f32 %v109, %v139
    %v158 = vadd.f32 %v110, %v153
    %v159 = vadd.f32 %v111, %v141
    %v160 = vadd.f32 %v112, %v155
    %161 = vst [vmem:[#allocation2] sm:$0xff] %v157
    %vm162 = vcmask 523264
    %163 = vst.msk [vmem:[#allocation2 + $0x8] sm:$0xff] %vm162, %v158
    %164 = vst [vmem:[#allocation2 + $0x10] sm:$0xff] %v159
    %165 = vst.msk [vmem:[#allocation2 + $0x18] sm:$0xff] %vm162, %v160
    // Predicated region
    $region26: #{transformer_forward.10} parent=1 // pred_check
      %p166 = pneg %p34
    $region27: #{transformer_forward.10} parent=1 // pred_check_branch
      %168 = sbr.rel (%p166) target = $region29
    $region28: #{transformer_forward.10} parent=1 // pred_region
      %v169 = vld [vmem:[#allocation2] sm:$0xff]
      %v170 = vld [vmem:[#allocation2 + $0x8] sm:$0xff]
      %v171 = vld [vmem:[#allocation2 + $0x10] sm:$0xff]
      %v172 = vld [vmem:[#allocation2 + $0x18] sm:$0xff]
      %173 = vst [vmem:[%s4] sm:$0xff] %v169
      %174 = vst.msk [vmem:[%s4 + $0x8] sm:$0xff] %vm162, %v170
      %175 = vst [vmem:[%s4 + $0x10] sm:$0xff] %v171
      %176 = vst.msk [vmem:[%s4 + $0x18] sm:$0xff] %vm162, %v172
    $region29: #{transformer_forward.10} parent=1 // pred_fallthru
      _
    // Predicated region
    $region30: #{transformer_forward.10} parent=1 // pred_check
      _
    $region31: #{transformer_forward.10} parent=1 // pred_check_branch
      %178 = sbr.rel (0) target = $region33
    $region32: #{transformer_forward.10} parent=1 // pred_region
      _
    $region33: #{transformer_forward.10} parent=1 // pred_fallthru
      _
    // Predicated region
    $region34: #{transformer_forward.10} parent=1 // pred_check
      _
    $region35: #{transformer_forward.10} parent=1 // pred_check_branch
      %180 = sbr.rel (0) target = $region37
    $region36: #{transformer_forward.10} parent=1 // pred_region
      _
    $region37: #{transformer_forward.10} parent=1 // pred_fallthru
      _
    %181 = vsyncpa [#allocation4], 1

// kernel: transformer_forward.12
$region0: #{transformer_forward.12}
  #allocation0 [shape = 'u32[]', space=smem, size = 0x4, offset = 0x4, fixed_abs, tag = 'smem constant byte address 0x4 - core index']
  #allocation1 [shape = 'u32[72,128]{1,0:T(1,128)}', space=vmem, size = 0x9000, scoped, tag = 'internal scratch']
  #allocation2 [shape = 'f32[16,32]{1,0:T(8,128)}', space=vmem, size = 0x2000, scoped, tag = 'scratch operand']
  %s0 = inlined_call_operand.vmem [shape: f32[16,64], index: 0, kind: input, shape index: {}]
  %s1 = inlined_call_operand.vmem [shape: f32[64,32], index: 1, kind: input, shape index: {}]
  %s2 = inlined_call_operand.vmem [shape: f32[1,32], index: 2, kind: input, shape index: {}]
  %s3 = inlined_call_operand.vmem [shape: f32[16,32], index: 3, kind: input, shape index: {}]
  %s4 = inlined_call_operand.vmem [shape: f32[16,32], index: 4, kind: output, shape index: {}]
  %s5 = sld [smem:[#allocation0]]
  $region34: #{transformer_forward.12} parent=0
    _
  %s7 = ssub.s32 1, %s5
  %s8 = scalar_select 0, %s7, %s5
  // Predicated region
  $region2: #{transformer_forward.12} parent=0 // pred_check
    _
  $region3: #{transformer_forward.12} parent=0 // pred_check_branch
    %10 = sbr.rel (0) target = $region5
  $region4: #{transformer_forward.12} parent=0 // pred_region
    _
  $region5: #{transformer_forward.12} parent=0 // pred_fallthru
    _
  // Predicated region
  $region6: #{transformer_forward.12} parent=0 // pred_check
    _
  $region7: #{transformer_forward.12} parent=0 // pred_check_branch
    %12 = sbr.rel (0) target = $region9
  $region8: #{transformer_forward.12} parent=0 // pred_region
    _
  $region9: #{transformer_forward.12} parent=0 // pred_fallthru
    _
  // Predicated region
  $region10: #{transformer_forward.12} parent=0 // pred_check
    _
  $region11: #{transformer_forward.12} parent=0 // pred_check_branch
    %14 = sbr.rel (0) target = $region13
  $region12: #{transformer_forward.12} parent=0 // pred_region
    _
  $region13: #{transformer_forward.12} parent=0 // pred_fallthru
    _
  // Predicated region
  $region14: #{transformer_forward.12} parent=0 // pred_check
    _
  $region15: #{transformer_forward.12} parent=0 // pred_check_branch
    %16 = sbr.rel (0) target = $region17
  $region16: #{transformer_forward.12} parent=0 // pred_region
    _
  $region17: #{transformer_forward.12} parent=0 // pred_fallthru
    _
  %p18 = scmp.eq.s32.totalorder 0, 0
  // Predicated region
  $region18: #{transformer_forward.12} parent=0 // pred_check
    %p19 = pneg %p18
  $region19: #{transformer_forward.12} parent=0 // pred_check_branch
    %21 = sbr.rel (%p19) target = $region21
  $region20: #{transformer_forward.12} parent=0 // pred_region
    %vm22 = vcmask 261120
    %23 = vst.msk [vmem:[#allocation2] sm:$0xff] %vm22, 0.0
    %24 = vst.msk [vmem:[#allocation2 + $0x8] sm:$0xff] %vm22, 0.0
  $region21: #{transformer_forward.12} parent=0 // pred_fallthru
    _
  %v25 = vld [vmem:[%s0] sm:$0xff]
  %v26 = vld [vmem:[%s0 + $0x8] sm:$0xff]
  %v27 = vld [vmem:[#allocation2] sm:$0xff]
  %v28 = vld [vmem:[#allocation2 + $0x8] sm:$0xff]
  %v29 = vpack.c.bf16 %v26, %v25
  %v30 = vld [vmem:[%s1] sm:$0xff]
  %v31 = vld [vmem:[%s1 + $0x8] sm:$0xff]
  %v32 = vld [vmem:[%s1 + $0x10] sm:$0xff]
  %v33 = vld [vmem:[%s1 + $0x18] sm:$0xff]
  %v34 = vld [vmem:[%s1 + $0x20] sm:$0xff]
  %v35 = vld [vmem:[%s1 + $0x28] sm:$0xff]
  %v36 = vld [vmem:[%s1 + $0x30] sm:$0xff]
  %v37 = vld [vmem:[%s1 + $0x38] sm:$0xff]
  %v38 = vpack.c.bf16 %v31, %v30
  %v39 = vpack.c.bf16 %v33, %v32
  %v40 = vpack.c.bf16 %v35, %v34
  %v41 = vpack.c.bf16 %v37, %v36
  %vm42 = vcmask 523264
  %v44 = vsel %vm42, %v29, 0
  %46 = vmatpush.bf16.msra.mxu0 0
  %47 = vmatpush.bf16.msra.mxu0 0
  %48 = vmatpush.bf16.msra.mxu0 0
  %49 = vmatpush.bf16.msra.mxu0 0
  %50 = vmatpush.bf16.msra.mxu0 %v41
  %51 = vmatpush.bf16.msra.mxu0 %v40
  %52 = vmatpush.bf16.msra.mxu0 %v39
  %53 = vmatpush.bf16.msra.mxu0 %v38
  %54 = vmatmul.bf16.gmra.mxu0 %v44
  %v55 = vpop.f32.mrf.mxu0
  %v56 = vadd.f32 0.0, %v55
  %v57 = vpop.f32.mrf.mxu0
  %v58 = vadd.f32 0.0, %v57
  %59 = vdwg.mxu0
  %v60 = vadd.f32 %v27, %v56
  %v61 = vadd.f32 %v28, %v58
  %vm62 = vcmask 261120
  %63 = vst.msk [vmem:[#allocation2] sm:$0xff] %vm62, %v60
  %64 = vst.msk [vmem:[#allocation2 + $0x8] sm:$0xff] %vm62, %v61
  // Predicated region
  $region22: #{transformer_forward.12} parent=0 // pred_check
    %p65 = pneg %p18
  $region23: #{transformer_forward.12} parent=0 // pred_check_branch
    %67 = sbr.rel (%p65) target = $region25
  $region24: #{transformer_forward.12} parent=0 // pred_region
    %v68 = vld [vmem:[#allocation2] sm:$0xff]
    %v69 = vld [vmem:[#allocation2 + $0x8] sm:$0xff]
    %v70 = vld [vmem:[%s2] sm:$0x1]
    %v72 = vperm.slane %v70, 0
    %v74 = vadd.f32 %v68, %v72
    %v75 = vadd.f32 %v69, %v72
    %v76 = vld [vmem:[%s3] sm:$0xff]
    %v77 = vld [vmem:[%s3 + $0x8] sm:$0xff]
    %v78 = vadd.f32 %v74, %v76
    %v79 = vadd.f32 %v75, %v77
    %80 = vst.msk [vmem:[%s4] sm:$0xff] %vm62, %v78
    %81 = vst.msk [vmem:[%s4 + $0x8] sm:$0xff] %vm62, %v79
  $region25: #{transformer_forward.12} parent=0 // pred_fallthru
    _
  // Predicated region
  $region26: #{transformer_forward.12} parent=0 // pred_check
    _
  $region27: #{transformer_forward.12} parent=0 // pred_check_branch
    %83 = sbr.rel (0) target = $region29
  $region28: #{transformer_forward.12} parent=0 // pred_region
    _
  $region29: #{transformer_forward.12} parent=0 // pred_fallthru
    _
  // Predicated region
  $region30: #{transformer_forward.12} parent=0 // pred_check
    _
  $region31: #{transformer_forward.12} parent=0 // pred_check_branch
    %85 = sbr.rel (0) target = $region33
  $region32: #{transformer_forward.12} parent=0 // pred_region
    _
  $region33: #{transformer_forward.12} parent=0 // pred_fallthru
    _

// kernel: transformer_forward.11
$region0: #{transformer_forward.11}
  #allocation0 [shape = 'u32[]', space=smem, size = 0x4, offset = 0x4, fixed_abs, tag = 'smem constant byte address 0x4 - core index']
  #allocation1 [shape = 'u32[72,128]{1,0:T(1,128)}', space=vmem, size = 0x9000, scoped, tag = 'internal scratch']
  #allocation2 [shape = 'f32[8,1]{1,0:T(8,128)}', space=vmem, size = 0x1000, scoped, tag = 'scratch operand']
  #allocation3 [shape = 'f32[8,1]{1,0:T(8,128)}', space=vmem, size = 0x1000, scoped, tag = 'scratch operand']
  #allocation4 [shape = 'f32[8,16]{1,0:T(8,128)}', space=vmem, size = 0x1000, scoped, tag = 'scratch operand']
  %s0 = inlined_call_operand.vmem [shape: f32[8,8,16], index: 0, kind: input, shape index: {}]
  %s1 = inlined_call_operand.vmem [shape: f32[8,8,16], index: 1, kind: input, shape index: {}]
  %s2 = inlined_call_operand.vmem [shape: f32[8,8,16], index: 2, kind: input, shape index: {}]
  %s3 = inlined_call_operand.vmem [shape: f32[8,8,16], index: 3, kind: output, shape index: {}]
  %s4 = sld [smem:[#allocation0]]
  $region53: #{transformer_forward.11} parent=0
    _
  %s6 = ssub.s32 1, %s4
  %s7 = scalar_select 0, %s6, %s4
  loop: start=0, step=1, limit=10
  $region2: #{transformer_forward.11} parent=0 // loop_pre_header
    _
  $region3: #{transformer_forward.11} parent=0 // loop_header
    %s9 = sphi 0, %s13
    %p10 = scmp.ge.s32.totalorder %s9, 10
    %s16 = sphi 0, %s35
    %s17 = sphi 0, %s31
    %s18 = sphi 0, %s27
    %s19 = sphi 0, %s16
    %s20 = sphi 0, %s17
    %s21 = sphi 0, %s18
    %s22 = sphi 0, %s19
    %s23 = sphi 0, %s20
    %s24 = sphi 0, %s21
    %s40 = sphi 0, %s42
    %s43 = sphi 0, %s40
    %s44 = sphi 0, %s43
    %s60 = sphi 0, %s44
    %s68 = sphi 0, %s70
    %s71 = sphi 0, %s68
    %s72 = sphi 0, %s71
    %s88 = sphi 0, %s72
    %s96 = sphi 0, %s98
    %s99 = sphi 0, %s96
    %s100 = sphi 0, %s99
    %s116 = sphi 0, %s100
    %s124 = sphi 0, %s126
    %s127 = sphi 0, %s124
    %s128 = sphi 0, %s127
    %s144 = sphi 0, %s128
  $region4: #{transformer_forward.11} parent=0 // loop_header_branch
    %12 = sbr.rel (%p10) target = $region8
  $region5: #{transformer_forward.11} parent=0 // loop_body
    %s14 = ssub.s32 %s9, 1
    %s15 = ssub.s32 %s9, 2
    %s25 = sadd.s32 1, %s18
    %p26 = scmp.ge.s32.totalorder %s25, 1
    %s27 = scalar_select %p26, 0, %s25
    %s28 = sadd.s32 1, %s17
    %s29 = scalar_select %p26, %s28, %s17
    %p30 = scmp.ge.s32.totalorder %s29, 1
    %s31 = scalar_select %p30, 0, %s29
    %s32 = sadd.s32 1, %s16
    %s33 = scalar_select %p30, %s32, %s16
    %p34 = scmp.ge.s32.totalorder %s33, 8
    %s35 = scalar_select %p34, 0, %s33
    %s36 = ssub.s32 %s16, %s35
    %s37 = ssub.s32 %s17, %s31
    %s38 = sor.u32 %s36, %s37
    %p39 = scmp.eq.s32.totalorder %s38, 0
    %s41 = sadd.s32 %s40, 1
    %s42 = scalar_select %p39, %s40, %s41
    %p45 = pneg %p39
    %p46 = scmp.eq.s32.totalorder %s9, 7
    %p47 = por %p45, %p46
    %p48 = scmp.ne.s32.totalorder %s40, %s43
    %p49 = scmp.eq.s32.totalorder %s9, 0
    %p50 = por %p48, %p49
    %p51 = scmp.ne.s32.totalorder %s40, %s43
    %p52 = scmp.eq.s32.totalorder %s14, 7
    %p53 = por %p51, %p52
    %p54 = scmp.ne.s32.totalorder %s43, %s44
    %p55 = scmp.eq.s32.totalorder %s14, 0
    %p56 = por %p54, %p55
    %p57 = scmp.ne.s32.totalorder %s43, %s44
    %p58 = scmp.eq.s32.totalorder %s15, 7
    %p59 = por %p57, %p58
    %p61 = scmp.ne.s32.totalorder %s44, %s60
    %p62 = scmp.eq.s32.totalorder %s15, 0
    %p63 = por %p61, %p62
    %s64 = ssub.s32 %s16, %s35
    %s65 = ssub.s32 %s18, %s27
    %s66 = sor.u32 %s64, %s65
    %p67 = scmp.eq.s32.totalorder %s66, 0
    %s69 = sadd.s32 %s68, 1
    %s70 = scalar_select %p67, %s68, %s69
    %p73 = pneg %p67
    %p74 = scmp.eq.s32.totalorder %s9, 7
    %p75 = por %p73, %p74
    %p76 = scmp.ne.s32.totalorder %s68, %s71
    %p77 = scmp.eq.s32.totalorder %s9, 0
    %p78 = por %p76, %p77
    %p79 = scmp.ne.s32.totalorder %s68, %s71
    %p80 = scmp.eq.s32.totalorder %s14, 7
    %p81 = por %p79, %p80
    %p82 = scmp.ne.s32.totalorder %s71, %s72
    %p83 = scmp.eq.s32.totalorder %s14, 0
    %p84 = por %p82, %p83
    %p85 = scmp.ne.s32.totalorder %s71, %s72
    %p86 = scmp.eq.s32.totalorder %s15, 7
    %p87 = por %p85, %p86
    %p89 = scmp.ne.s32.totalorder %s72, %s88
    %p90 = scmp.eq.s32.totalorder %s15, 0
    %p91 = por %p89, %p90
    %s92 = ssub.s32 %s16, %s35
    %s93 = ssub.s32 %s18, %s27
    %s94 = sor.u32 %s92, %s93
    %p95 = scmp.eq.s32.totalorder %s94, 0
    %s97 = sadd.s32 %s96, 1
    %s98 = scalar_select %p95, %s96, %s97
    %p101 = pneg %p95
    %p102 = scmp.eq.s32.totalorder %s9, 7
    %p103 = por %p101, %p102
    %p104 = scmp.ne.s32.totalorder %s96, %s99
    %p105 = scmp.eq.s32.totalorder %s9, 0
    %p106 = por %p104, %p105
    %p107 = scmp.ne.s32.totalorder %s96, %s99
    %p108 = scmp.eq.s32.totalorder %s14, 7
    %p109 = por %p107, %p108
    %p110 = scmp.ne.s32.totalorder %s99, %s100
    %p111 = scmp.eq.s32.totalorder %s14, 0
    %p112 = por %p110, %p111
    %p113 = scmp.ne.s32.totalorder %s99, %s100
    %p114 = scmp.eq.s32.totalorder %s15, 7
    %p115 = por %p113, %p114
    %p117 = scmp.ne.s32.totalorder %s100, %s116
    %p118 = scmp.eq.s32.totalorder %s15, 0
    %p119 = por %p117, %p118
    %s120 = ssub.s32 %s16, %s35
    %s121 = ssub.s32 %s17, %s31
    %s122 = sor.u32 %s120, %s121
    %p123 = scmp.eq.s32.totalorder %s122, 0
    %s125 = sadd.s32 %s124, 1
    %s126 = scalar_select %p123, %s124, %s125
    %p129 = pneg %p123
    %p130 = scmp.eq.s32.totalorder %s9, 7
    %p131 = por %p129, %p130
    %p132 = scmp.ne.s32.totalorder %s124, %s127
    %p133 = scmp.eq.s32.totalorder %s9, 0
    %p134 = por %p132, %p133
    %p135 = scmp.ne.s32.totalorder %s124, %s127
    %p136 = scmp.eq.s32.totalorder %s14, 7
    %p137 = por %p135, %p136
    %p138 = scmp.ne.s32.totalorder %s127, %s128
    %p139 = scmp.eq.s32.totalorder %s14, 0
    %p140 = por %p138, %p139
    %p141 = scmp.ne.s32.totalorder %s127, %s128
    %p142 = scmp.eq.s32.totalorder %s15, 7
    %p143 = por %p141, %p142
    %p145 = scmp.ne.s32.totalorder %s128, %s144
    %p146 = scmp.eq.s32.totalorder %s15, 0
    %p147 = por %p145, %p146
    %p148 = scmp.le.s32.totalorder 1, %s9
    %p149 = scmp.lt.s32.totalorder %s9, 9
    %p150 = pnand %p148, %p149
    %p151 = pneg %p150
    // Predicated region
    $region9: #{transformer_forward.11} parent=5 // pred_check
      _
    $region10: #{transformer_forward.11} parent=5 // pred_check_branch
      %153 = sbr.rel (%p150) target = $region12
    $region11: #{transformer_forward.11} parent=5 // pred_region
      %s154 = ssub.s32 %s9, 1
    $region12: #{transformer_forward.11} parent=5 // pred_fallthru
      _
    %p155 = scmp.lt.s32.totalorder %s9, 8
    // Predicated region
    $region13: #{transformer_forward.11} parent=5 // pred_check
      %p156 = pneg %p155
    $region14: #{transformer_forward.11} parent=5 // pred_check_branch
      %158 = sbr.rel (%p156) target = $region16
    $region15: #{transformer_forward.11} parent=5 // pred_region
      // Predicated region
      $region17: #{transformer_forward.11} parent=15 // pred_check
        %p159 = pneg %p50
      $region18: #{transformer_forward.11} parent=15 // pred_check_branch
        %161 = sbr.rel (%p159) target = $region20
      $region19: #{transformer_forward.11} parent=15 // pred_region
        %p162 = scmp.lt.s32.totalorder %s16, 7
        %s163 = scalar_select %p162, %s16, 7
        %p164 = scmp.lt.s32.totalorder %s17, 0
        %s165 = scalar_select %p164, %s17, 0
        %s166 = sadd.s32 %s165, %s163
        %s167 = smul.addr %s166, 8
        %s168 = scalar_lea.vmem %s0, %s167
      $region20: #{transformer_forward.11} parent=15 // pred_fallthru
        _
      // Predicated region
      $region21: #{transformer_forward.11} parent=15 // pred_check
        %p169 = pneg %p78
      $region22: #{transformer_forward.11} parent=15 // pred_check_branch
        %171 = sbr.rel (%p169) target = $region24
      $region23: #{transformer_forward.11} parent=15 // pred_region
        %p172 = scmp.lt.s32.totalorder %s16, 7
        %s173 = scalar_select %p172, %s16, 7
        %p174 = scmp.lt.s32.totalorder %s18, 0
        %s175 = scalar_select %p174, %s18, 0
        %s176 = sadd.s32 %s175, %s173
        %s177 = smul.addr %s176, 8
        %s178 = scalar_lea.vmem %s1, %s177
      $region24: #{transformer_forward.11} parent=15 // pred_fallthru
        _
      // Predicated region
      $region25: #{transformer_forward.11} parent=15 // pred_check
        %p179 = pneg %p106
      $region26: #{transformer_forward.11} parent=15 // pred_check_branch
        %181 = sbr.rel (%p179) target = $region28
      $region27: #{transformer_forward.11} parent=15 // pred_region
        %p182 = scmp.lt.s32.totalorder %s16, 7
        %s183 = scalar_select %p182, %s16, 7
        %p184 = scmp.lt.s32.totalorder %s18, 0
        %s185 = scalar_select %p184, %s18, 0
        %s186 = sadd.s32 %s185, %s183
        %s187 = smul.addr %s186, 8
        %s188 = scalar_lea.vmem %s2, %s187
      $region28: #{transformer_forward.11} parent=15 // pred_fallthru
        _
    $region16: #{transformer_forward.11} parent=5 // pred_fallthru
      _
    %p189 = scmp.le.s32.totalorder 1, %s9
    %p190 = scmp.lt.s32.totalorder %s9, 9
    %p191 = pnand %p189, %p190
    %p192 = pneg %p191
    // Predicated region
    $region29: #{transformer_forward.11} parent=5 // pred_check
      _
    $region30: #{transformer_forward.11} parent=5 // pred_check_branch
      %194 = sbr.rel (%p191) target = $region32
    $region31: #{transformer_forward.11} parent=5 // pred_region
      %s195 = ssub.s32 %s9, 1
      %p196 = scmp.lt.s32.totalorder %s19, 7
      %s197 = scalar_select %p196, %s19, 7
      %p198 = scmp.lt.s32.totalorder %s20, 0
      %s199 = scalar_select %p198, %s20, 0
      %s200 = sadd.s32 %s199, %s197
      %s201 = smul.addr %s200, 8
      %s202 = scalar_lea.vmem %s0, %s201
      %p203 = pneg %p56
      %p204 = pneg %p53
      %p205 = scmp.lt.s32.totalorder %s19, 7
      %s206 = scalar_select %p205, %s19, 7
      %p207 = scmp.lt.s32.totalorder %s21, 0
      %s208 = scalar_select %p207, %s21, 0
      %s209 = sadd.s32 %s208, %s206
      %s210 = smul.addr %s209, 8
      %s211 = scalar_lea.vmem %s1, %s210
      %p212 = pneg %p84
      %p213 = pneg %p81
      %p214 = scmp.lt.s32.totalorder %s19, 7
      %s215 = scalar_select %p214, %s19, 7
      %p216 = scmp.lt.s32.totalorder %s21, 0
      %s217 = scalar_select %p216, %s21, 0
      %s218 = sadd.s32 %s217, %s215
      %s219 = smul.addr %s218, 8
      %s220 = scalar_lea.vmem %s2, %s219
      %p221 = pneg %p112
      %p222 = pneg %p109
      %p223 = pneg %p140
      %p224 = pneg %p137
      %p225 = scmp.lt.s32.totalorder %s19, 7
      %s226 = scalar_select %p225, %s19, 7
      %p227 = scmp.lt.s32.totalorder %s20, 0
      %s228 = scalar_select %p227, %s20, 0
      %s229 = sadd.s32 %s228, %s226
      %s230 = smul.addr %s229, 8
      %s231 = scalar_lea.vmem %s3, %s230
      %p232 = scmp.lt.s32.totalorder %s19, 7
      %s233 = scalar_select %p232, %s19, 7
      %p234 = scmp.lt.s32.totalorder %s20, 0
      %s235 = scalar_select %p234, %s20, 0
      %s236 = sadd.s32 %s235, %s233
      %s237 = smul.addr %s236, 8
      %s238 = scalar_lea.vmem %s0, %s237
      %p239 = scmp.lt.s32.totalorder %s19, 7
      %s240 = scalar_select %p239, %s19, 7
      %p241 = scmp.lt.s32.totalorder %s21, 0
      %s242 = scalar_select %p241, %s21, 0
      %s243 = sadd.s32 %s242, %s240
      %s244 = smul.addr %s243, 8
      %s245 = scalar_lea.vmem %s1, %s244
      %p246 = scmp.lt.s32.totalorder %s19, 7
      %s247 = scalar_select %p246, %s19, 7
      %p248 = scmp.lt.s32.totalorder %s21, 0
      %s249 = scalar_select %p248, %s21, 0
      %s250 = sadd.s32 %s249, %s247
      %s251 = smul.addr %s250, 8
      %s252 = scalar_lea.vmem %s2, %s251
      %p253 = scmp.lt.s32.totalorder %s19, 7
      %s254 = scalar_select %p253, %s19, 7
      %p255 = scmp.lt.s32.totalorder %s20, 0
      %s256 = scalar_select %p255, %s20, 0
      %s257 = sadd.s32 %s256, %s254
      %s258 = smul.addr %s257, 8
      %s259 = scalar_lea.vmem %s3, %s258
      %p261 = scmp.eq.s32.totalorder %s21, 0
      // Predicated region
      $region33: #{transformer_forward.11} parent=31 // pred_check
        %p262 = pneg %p261
      $region34: #{transformer_forward.11} parent=31 // pred_check_branch
        %264 = sbr.rel (%p262) target = $region36
      $region35: #{transformer_forward.11} parent=31 // pred_region
        %vm265 = vcmask 7168
        %266 = vst.msk [vmem:[#allocation2] sm:$0xff] %vm265, -inf
        %267 = vst.msk [vmem:[#allocation3] sm:$0xff] %vm265, 0.0
        %vm268 = vcmask 130048
        %269 = vst.msk [vmem:[#allocation4] sm:$0xff] %vm268, 0.0
      $region36: #{transformer_forward.11} parent=31 // pred_fallthru
        _
      %v270 = vld [vmem:[%s238] sm:$0xff]
      %v271 = vmul.f32 %v270, 0.25
      %v272 = vpack.c.bf16 %v271, %v271
      %v273 = vld [vmem:[%s245] sm:$0xff]
      %v274 = vpack.c.bf16 %v273, %v273
      %vm275 = vcmask 130048
      %v277 = vsel %vm275, %v272, 0
      %v280 = vsel %vm275, %v274, 0
      %282 = vmatpush.bf16.xpose.msra.mxu0 0
      %283 = vmatpush.bf16.xpose.msra.mxu0 0
      %284 = vmatpush.bf16.xpose.msra.mxu0 0
      %285 = vmatpush.bf16.xpose.msra.mxu0 0
      %286 = vmatpush.bf16.xpose.msra.mxu0 0
      %287 = vmatpush.bf16.xpose.msra.mxu0 0
      %288 = vmatpush.bf16.xpose.msra.mxu0 0
      %289 = vmatpush.bf16.xpose.msra.mxu0 %v280
      %290 = vmatmul.bf16.gmra.mxu0 %v277
      %v291 = vpop.f32.mrf.mxu0
      %v292 = vadd.f32 0.0, %v291
      %v293 = vpop.f32.mrf.mxu0
      %294 = vdwg.mxu0
      %v295 = vld [vmem:[#allocation2] sm:$0xff]
      %vm296 = vcmask 64512
      %v297 = vsel %vm296, %v292, -inf
      %298 = vmax.xlane.f32.xlu0 %v297
      %v299 = vpop.xlane.xlu0 %298
      %v300 = vmax.f32 %v295, %v299
      %v301 = vsub.f32 %v295, %v300
      %v302 = vmul.f32 %v301, 1.442695
      %v303 = vpow.pop %v302
      %305 = vset.pattern.permute.xlu0 0
      %306 = vperm.xlu0 %305, %v300
      %v307 = vpop.permute.xlu0 %306
      %v309 = vsub.f32 %v292, %v307
      %v310 = vmul.f32 %v309, 1.442695
      %v311 = vpow.pop %v310
      %v312 = vld [vmem:[#allocation3] sm:$0xff]
      %v313 = vmul.f32 %v303, %v312
      %v314 = vsel %vm296, %v311, 0.0
      %315 = vadd.xlane.f32.xlu0 %v314
      %v316 = vpop.xlane.xlu0 %315
      %v317 = vadd.f32 %v313, %v316
      %vm318 = vcmask 7168
      %319 = vst.msk [vmem:[#allocation3] sm:$0xff] %vm318, %v317
      %v320 = vld [vmem:[#allocation4] sm:$0xff]
      %322 = vset.pattern.permute.xlu0 0
      %323 = vperm.xlu0 %322, %v303
      %v324 = vpop.permute.xlu0 %323
      %v326 = vmul.f32 %v324, %v320
      %v327 = vpack.c.bf16 %v311, %v311
      %v328 = vld [vmem:[%s252] sm:$0xff]
      %v329 = vpack.c.bf16 %v328, %v328
      %v331 = vsel %vm296, %v327, 0
      %vm333 = vcmask 1043456
      %v335 = vsel %vm333, %v329, 0
      %337 = vmatpush.bf16.msra.mxu0 0
      %338 = vmatpush.bf16.msra.mxu0 0
      %339 = vmatpush.bf16.msra.mxu0 0
      %340 = vmatpush.bf16.msra.mxu0 0
      %341 = vmatpush.bf16.msra.mxu0 0
      %342 = vmatpush.bf16.msra.mxu0 0
      %343 = vmatpush.bf16.msra.mxu0 0
      %344 = vmatpush.bf16.msra.mxu0 %v335
      %345 = vmatmul.bf16.gmra.mxu0 %v331
      %v346 = vpop.f32.mrf.mxu0
      %v347 = vadd.f32 0.0, %v346
      %v348 = vpop.f32.mrf.mxu0
      %349 = vdwg.mxu0
      %v350 = vadd.f32 %v326, %v347
      %351 = vst.msk [vmem:[#allocation4] sm:$0xff] %vm275, %v350
      %352 = vst.msk [vmem:[#allocation2] sm:$0xff] %vm318, %v300
      // Predicated region
      $region37: #{transformer_forward.11} parent=31 // pred_check
        %p353 = pneg %p261
      $region38: #{transformer_forward.11} parent=31 // pred_check_branch
        %355 = sbr.rel (%p353) target = $region40
      $region39: #{transformer_forward.11} parent=31 // pred_region
        %v356 = vld [vmem:[#allocation4] sm:$0xff]
        %v357 = vld [vmem:[#allocation3] sm:$0xff]
        %359 = vset.pattern.permute.xlu0 0
        %360 = vperm.xlu0 %359, %v357
        %v361 = vpop.permute.xlu0 %360
        %v363 = vrcp.pop %v361
        %v364 = vmul.f32 %v361, %v363
        %v365 = vsub.f32 1.0, %v364
        %v366 = vmul.f32 %v363, %v365
        %v367 = vadd.f32 %v363, %v366
        %vm368 = vweird.f32 %v361
        %vm369 = vweird.f32 %v363
        %vm370 = vmor %vm368, %vm369
        %v371 = vsel %vm370, %v363, %v367
        %v372 = vand.u32 2147483647, %v361
        %vm373 = vcmp.eq.f32.partialorder %v372, 8.507059e+37
        %v374 = vand.u32 %v361, 2147483648
        %v375 = vor.u32 1.1754944e-38, %v374
        %v376 = vsel %vm373, %v375, %v371
        %v377 = vmul.f32 %v356, %v376
        %378 = vst.msk [vmem:[%s259] sm:$0xff] %vm275, %v377
      $region40: #{transformer_forward.11} parent=31 // pred_fallthru
        _
      %p379 = scmp.lt.s32.totalorder %s19, 7
      %s380 = scalar_select %p379, %s19, 7
      %p381 = scmp.lt.s32.totalorder %s20, 0
      %s382 = scalar_select %p381, %s20, 0
      %s383 = sadd.s32 %s382, %s380
      %s384 = smul.addr %s383, 8
      %s385 = scalar_lea.vmem %s3, %s384
      // Predicated region
      $region41: #{transformer_forward.11} parent=31 // pred_check
        %p386 = pneg %p137
      $region42: #{transformer_forward.11} parent=31 // pred_check_branch
        %388 = sbr.rel (%p386) target = $region44
      $region43: #{transformer_forward.11} parent=31 // pred_region
        _
      $region44: #{transformer_forward.11} parent=31 // pred_fallthru
        _
    $region32: #{transformer_forward.11} parent=5 // pred_fallthru
      _
    %p389 = scmp.le.s32.totalorder 2, %s9
    // Predicated region
    $region45: #{transformer_forward.11} parent=5 // pred_check
      %p390 = pneg %p389
    $region46: #{transformer_forward.11} parent=5 // pred_check_branch
      %392 = sbr.rel (%p390) target = $region48
    $region47: #{transformer_forward.11} parent=5 // pred_region
      %s393 = ssub.s32 %s9, 2
      // Predicated region
      $region49: #{transformer_forward.11} parent=47 // pred_check
        %p394 = pneg %p143
      $region50: #{transformer_forward.11} parent=47 // pred_check_branch
        %396 = sbr.rel (%p394) target = $region52
      $region51: #{transformer_forward.11} parent=47 // pred_region
        %p397 = scmp.lt.s32.totalorder %s22, 7
        %s398 = scalar_select %p397, %s22, 7
        %p399 = scmp.lt.s32.totalorder %s23, 0
        %s400 = scalar_select %p399, %s23, 0
        %s401 = sadd.s32 %s400, %s398
        %s402 = smul.addr %s401, 8
        %s403 = scalar_lea.vmem %s3, %s402
      $region52: #{transformer_forward.11} parent=47 // pred_fallthru
        _
    $region48: #{transformer_forward.11} parent=5 // pred_fallthru
      _
  $region6: #{transformer_forward.11} parent=0 // loop_footer
    %s13 = sadd.s32 1, %s9
  $region7: #{transformer_forward.11} parent=0 // loop_footer_branch
    %8 = sbr.rel target = $region3
  $region8: #{transformer_forward.11} parent=0 // loop_exit
    _

// kernel: transformer_forward.13
$region0: #{transformer_forward.13}
  #allocation0 [shape = 'u32[]', space=smem, size = 0x4, offset = 0x4, fixed_abs, tag = 'smem constant byte address 0x4 - core index']
  #allocation1 [shape = 'u32[72,128]{1,0:T(1,128)}', space=vmem, size = 0x9000, scoped, tag = 'internal scratch']
  #allocation2 [shape = 'f32[16,64]{1,0:T(8,128)}', space=vmem, size = 0x2000, scoped, tag = 'scratch operand']
  %s0 = inlined_call_operand.vmem [shape: f32[16,32], index: 0, kind: input, shape index: {}]
  %s1 = inlined_call_operand.vmem [shape: f32[32,64], index: 1, kind: input, shape index: {}]
  %s2 = inlined_call_operand.vmem [shape: f32[1,32], index: 2, kind: input, shape index: {}]
  %s3 = inlined_call_operand.vmem [shape: f32[1,32], index: 3, kind: input, shape index: {}]
  %s4 = inlined_call_operand.vmem [shape: f32[1,64], index: 4, kind: input, shape index: {}]
  %s5 = inlined_call_operand.vmem [shape: f32[16,64], index: 5, kind: output, shape index: {}]
  %s6 = sld [smem:[#allocation0]]
  $region38: #{transformer_forward.13} parent=0
    _
  %s8 = ssub.s32 1, %s6
  %s9 = scalar_select 0, %s8, %s6
  // Predicated region
  $region2: #{transformer_forward.13} parent=0 // pred_check
    _
  $region3: #{transformer_forward.13} parent=0 // pred_check_branch
    %11 = sbr.rel (0) target = $region5
  $region4: #{transformer_forward.13} parent=0 // pred_region
    _
  $region5: #{transformer_forward.13} parent=0 // pred_fallthru
    _
  // Predicated region
  $region6: #{transformer_forward.13} parent=0 // pred_check
    _
  $region7: #{transformer_forward.13} parent=0 // pred_check_branch
    %13 = sbr.rel (0) target = $region9
  $region8: #{transformer_forward.13} parent=0 // pred_region
    _
  $region9: #{transformer_forward.13} parent=0 // pred_fallthru
    _
  // Predicated region
  $region10: #{transformer_forward.13} parent=0 // pred_check
    _
  $region11: #{transformer_forward.13} parent=0 // pred_check_branch
    %15 = sbr.rel (0) target = $region13
  $region12: #{transformer_forward.13} parent=0 // pred_region
    _
  $region13: #{transformer_forward.13} parent=0 // pred_fallthru
    _
  // Predicated region
  $region14: #{transformer_forward.13} parent=0 // pred_check
    _
  $region15: #{transformer_forward.13} parent=0 // pred_check_branch
    %17 = sbr.rel (0) target = $region17
  $region16: #{transformer_forward.13} parent=0 // pred_region
    _
  $region17: #{transformer_forward.13} parent=0 // pred_fallthru
    _
  // Predicated region
  $region18: #{transformer_forward.13} parent=0 // pred_check
    _
  $region19: #{transformer_forward.13} parent=0 // pred_check_branch
    %19 = sbr.rel (0) target = $region21
  $region20: #{transformer_forward.13} parent=0 // pred_region
    _
  $region21: #{transformer_forward.13} parent=0 // pred_fallthru
    _
  %p21 = scmp.eq.s32.totalorder 0, 0
  // Predicated region
  $region22: #{transformer_forward.13} parent=0 // pred_check
    %p22 = pneg %p21
  $region23: #{transformer_forward.13} parent=0 // pred_check_branch
    %24 = sbr.rel (%p22) target = $region25
  $region24: #{transformer_forward.13} parent=0 // pred_region
    %vm25 = vcmask 523264
    %26 = vst.msk [vmem:[#allocation2] sm:$0xff] %vm25, 0.0
    %27 = vst.msk [vmem:[#allocation2 + $0x8] sm:$0xff] %vm25, 0.0
  $region25: #{transformer_forward.13} parent=0 // pred_fallthru
    _
  %v28 = vld [vmem:[%s0] sm:$0xff]
  %v29 = vld [vmem:[%s0 + $0x8] sm:$0xff]
  %vm30 = vcmask 261120
  %v31 = vsel %vm30, %v28, 0.0
  %32 = vadd.xlane.f32.xlu0 %v31
  %v33 = vpop.xlane.xlu0 %32
  %v34 = vsel %vm30, %v29, 0.0
  %35 = vadd.xlane.f32.xlu0 %v34
  %v36 = vpop.xlane.xlu0 %35
  %v37 = vrcp.pop 32.0
  %v38 = vmul.f32 32.0, %v37
  %v39 = vsub.f32 1.0, %v38
  %v40 = vmul.f32 %v37, %v39
  %v41 = vadd.f32 %v37, %v40
  %vm42 = vweird.f32 %v37
  %v43 = vsel %vm42, %v37, %v41
  %v44 = vmul.f32 %v33, %v43
  %v45 = vmul.f32 %v36, %v43
  %v46 = vsub.f32 %v28, %v44
  %v47 = vsub.f32 %v29, %v45
  %v48 = vmul.f32 %v46, %v46
  %v49 = vmul.f32 %v47, %v47
  %v50 = vsel %vm30, %v48, 0.0
  %51 = vadd.xlane.f32.xlu0 %v50
  %v52 = vpop.xlane.xlu0 %51
  %v53 = vsel %vm30, %v49, 0.0
  %54 = vadd.xlane.f32.xlu0 %v53
  %v55 = vpop.xlane.xlu0 %54
  %v56 = vmul.f32 %v52, %v43
  %v57 = vmul.f32 %v55, %v43
  %v58 = vadd.f32 %v56, 1e-05
  %v59 = vadd.f32 %v57, 1e-05
  %v60 = vrsqrt.pop %v58
  %v61 = vmul.f32 %v60, %v58
  %v62 = vmul.f32 %v61, %v60
  %v63 = vmul.f32 0.5, %v62
  %v64 = vsub.f32 1.5, %v63
  %v65 = vmul.f32 %v60, %v64
  %vm66 = vweird.f32 %v58
  %vm67 = vweird.f32 %v60
  %vm68 = vmor %vm66, %vm67
  %v69 = vsel %vm68, %v60, %v65
  %v70 = vrsqrt.pop %v59
  %v71 = vmul.f32 %v70, %v59
  %v72 = vmul.f32 %v71, %v70
  %v73 = vmul.f32 0.5, %v72
  %v74 = vsub.f32 1.5, %v73
  %v75 = vmul.f32 %v70, %v74
  %vm76 = vweird.f32 %v59
  %vm77 = vweird.f32 %v70
  %vm78 = vmor %vm76, %vm77
  %v79 = vsel %vm78, %v70, %v75
  %v80 = vmul.f32 %v46, %v69
  %v81 = vmul.f32 %v47, %v79
  %v82 = vld [vmem:[%s2] sm:$0x1]
  %v84 = vperm.slane %v82, 0
  %v86 = vmul.f32 %v80, %v84
  %v87 = vmul.f32 %v81, %v84
  %v88 = vld [vmem:[%s3] sm:$0x1]
  %v90 = vperm.slane %v88, 0
  %v92 = vadd.f32 %v86, %v90
  %v93 = vadd.f32 %v87, %v90
  %v94 = vld [vmem:[#allocation2] sm:$0xff]
  %v95 = vld [vmem:[#allocation2 + $0x8] sm:$0xff]
  %v96 = vpack.c.bf16 %v93, %v92
  %v97 = vld [vmem:[%s1] sm:$0xff]
  %v98 = vld [vmem:[%s1 + $0x8] sm:$0xff]
  %v99 = vld [vmem:[%s1 + $0x10] sm:$0xff]
  %v100 = vld [vmem:[%s1 + $0x18] sm:$0xff]
  %v101 = vpack.c.bf16 %v98, %v97
  %v102 = vpack.c.bf16 %v100, %v99
  %v104 = vsel %vm30, %v96, 0
  %106 = vmatpush.bf16.msra.mxu0 0
  %107 = vmatpush.bf16.msra.mxu0 0
  %108 = vmatpush.bf16.msra.mxu0 0
  %109 = vmatpush.bf16.msra.mxu0 0
  %110 = vmatpush.bf16.msra.mxu0 0
  %111 = vmatpush.bf16.msra.mxu0 0
  %112 = vmatpush.bf16.msra.mxu0 %v102
  %113 = vmatpush.bf16.msra.mxu0 %v101
  %114 = vmatmul.bf16.gmra.mxu0 %v104
  %v115 = vpop.f32.mrf.mxu0
  %v116 = vadd.f32 0.0, %v115
  %v117 = vpop.f32.mrf.mxu0
  %v118 = vadd.f32 0.0, %v117
  %119 = vdwg.mxu0
  %v120 = vadd.f32 %v94, %v116
  %v121 = vadd.f32 %v95, %v118
  %vm122 = vcmask 523264
  %123 = vst.msk [vmem:[#allocation2] sm:$0xff] %vm122, %v120
  %124 = vst.msk [vmem:[#allocation2 + $0x8] sm:$0xff] %vm122, %v121
  // Predicated region
  $region26: #{transformer_forward.13} parent=0 // pred_check
    %p125 = pneg %p21
  $region27: #{transformer_forward.13} parent=0 // pred_check_branch
    %127 = sbr.rel (%p125) target = $region29
  $region28: #{transformer_forward.13} parent=0 // pred_region
    %v128 = vld [vmem:[#allocation2] sm:$0xff]
    %v129 = vld [vmem:[#allocation2 + $0x8] sm:$0xff]
    %v130 = vld [vmem:[%s4] sm:$0x1]
    %v132 = vperm.slane %v130, 0
    %v134 = vadd.f32 %v128, %v132
    %v135 = vadd.f32 %v129, %v132
    %v136 = vmul.f32 %v134, %v134
    %v137 = vmul.f32 %v135, %v135
    %v138 = vmul.f32 %v134, %v136
    %v139 = vmul.f32 %v135, %v137
    %v140 = vmul.f32 %v138, 0.044715
    %v141 = vmul.f32 %v139, 0.044715
    %v142 = vadd.f32 %v134, %v140
    %v143 = vadd.f32 %v135, %v141
    %v144 = vmul.f32 %v142, 0.7978846
    %v145 = vmul.f32 %v143, 0.7978846
    %v146 = vtanh.pop %v144
    %v147 = vtanh.pop %v145
    %v148 = vadd.f32 %v146, 1.0
    %v149 = vadd.f32 %v147, 1.0
    %v150 = vmul.f32 %v148, 0.5
    %v151 = vmul.f32 %v149, 0.5
    %v152 = vmul.f32 %v134, %v150
    %v153 = vmul.f32 %v135, %v151
    %154 = vst.msk [vmem:[%s5] sm:$0xff] %vm122, %v152
    %155 = vst.msk [vmem:[%s5 + $0x8] sm:$0xff] %vm122, %v153
  $region29: #{transformer_forward.13} parent=0 // pred_fallthru
    _
  // Predicated region
  $region30: #{transformer_forward.13} parent=0 // pred_check
    _
  $region31: #{transformer_forward.13} parent=0 // pred_check_branch
    %157 = sbr.rel (0) target = $region33
  $region32: #{transformer_forward.13} parent=0 // pred_region
    _
  $region33: #{transformer_forward.13} parent=0 // pred_fallthru
    _
  // Predicated region
  $region34: #{transformer_forward.13} parent=0 // pred_check
    _
  $region35: #{transformer_forward.13} parent=0 // pred_check_branch
    %159 = sbr.rel (0) target = $region37
  $region36: #{transformer_forward.13} parent=0 // pred_region
    _
  $region37: #{transformer_forward.13} parent=0 // pred_fallthru
    _

// kernel: transformer_forward.19
$region0: #{transformer_forward.19}
  #allocation0 [shape = 'u32[]', space=smem, size = 0x4, offset = 0x4, fixed_abs, tag = 'smem constant byte address 0x4 - core index']
  #allocation1 [shape = 'u32[72,128]{1,0:T(1,128)}', space=vmem, size = 0x9000, scoped, tag = 'internal scratch']
  #allocation2 [shape = 'f32[16,32]{1,0:T(8,128)}', space=vmem, size = 0x2000, scoped, tag = 'scratch operand']
  %s0 = inlined_call_operand.vmem [shape: f32[16,64], index: 0, kind: input, shape index: {}]
  %s1 = inlined_call_operand.vmem [shape: f32[64,32], index: 1, kind: input, shape index: {}]
  %s2 = inlined_call_operand.vmem [shape: f32[1,32], index: 2, kind: input, shape index: {}]
  %s3 = inlined_call_operand.vmem [shape: f32[16,32], index: 3, kind: input, shape index: {}]
  %s4 = inlined_call_operand.hbm [shape: f32[16,32], index: 4, kind: output, shape index: {}]
  %s5 = sld [smem:[#allocation0]]
  $region34: #{transformer_forward.19} parent=0
    _
  %s7 = ssub.s32 1, %s5
  %s8 = scalar_select 0, %s7, %s5
  $region1: #{transformer_forward.19} parent=0
    #allocation3 [shape = 'u8[8192]{0}', space=vmem, size = 0x2000, scoped, tag = 'output window, operand 0, single buffered']
    #allocation4 [shape = 's32[1]{0}', space=sflag, size = 0x4, scoped, tag = 'scoped memory for transformer_forward.19']
    %9 = vsyncpa [#allocation4], 0
    // Predicated region
    $region2: #{transformer_forward.19} parent=1 // pred_check
      _
    $region3: #{transformer_forward.19} parent=1 // pred_check_branch
      %11 = sbr.rel (0) target = $region5
    $region4: #{transformer_forward.19} parent=1 // pred_region
      _
    $region5: #{transformer_forward.19} parent=1 // pred_fallthru
      _
    // Predicated region
    $region6: #{transformer_forward.19} parent=1 // pred_check
      _
    $region7: #{transformer_forward.19} parent=1 // pred_check_branch
      %13 = sbr.rel (0) target = $region9
    $region8: #{transformer_forward.19} parent=1 // pred_region
      _
    $region9: #{transformer_forward.19} parent=1 // pred_fallthru
      _
    // Predicated region
    $region10: #{transformer_forward.19} parent=1 // pred_check
      _
    $region11: #{transformer_forward.19} parent=1 // pred_check_branch
      %15 = sbr.rel (0) target = $region13
    $region12: #{transformer_forward.19} parent=1 // pred_region
      _
    $region13: #{transformer_forward.19} parent=1 // pred_fallthru
      _
    // Predicated region
    $region14: #{transformer_forward.19} parent=1 // pred_check
      _
    $region15: #{transformer_forward.19} parent=1 // pred_check_branch
      %17 = sbr.rel (0) target = $region17
    $region16: #{transformer_forward.19} parent=1 // pred_region
      _
    $region17: #{transformer_forward.19} parent=1 // pred_fallthru
      _
    %p19 = scmp.eq.s32.totalorder 0, 0
    // Predicated region
    $region18: #{transformer_forward.19} parent=1 // pred_check
      %p20 = pneg %p19
    $region19: #{transformer_forward.19} parent=1 // pred_check_branch
      %22 = sbr.rel (%p20) target = $region21
    $region20: #{transformer_forward.19} parent=1 // pred_region
      %vm23 = vcmask 261120
      %24 = vst.msk [vmem:[#allocation2] sm:$0xff] %vm23, 0.0
      %25 = vst.msk [vmem:[#allocation2 + $0x8] sm:$0xff] %vm23, 0.0
    $region21: #{transformer_forward.19} parent=1 // pred_fallthru
      _
    %v26 = vld [vmem:[%s0] sm:$0xff]
    %v27 = vld [vmem:[%s0 + $0x8] sm:$0xff]
    %v28 = vld [vmem:[#allocation2] sm:$0xff]
    %v29 = vld [vmem:[#allocation2 + $0x8] sm:$0xff]
    %v30 = vpack.c.bf16 %v27, %v26
    %v31 = vld [vmem:[%s1] sm:$0xff]
    %v32 = vld [vmem:[%s1 + $0x8] sm:$0xff]
    %v33 = vld [vmem:[%s1 + $0x10] sm:$0xff]
    %v34 = vld [vmem:[%s1 + $0x18] sm:$0xff]
    %v35 = vld [vmem:[%s1 + $0x20] sm:$0xff]
    %v36 = vld [vmem:[%s1 + $0x28] sm:$0xff]
    %v37 = vld [vmem:[%s1 + $0x30] sm:$0xff]
    %v38 = vld [vmem:[%s1 + $0x38] sm:$0xff]
    %v39 = vpack.c.bf16 %v32, %v31
    %v40 = vpack.c.bf16 %v34, %v33
    %v41 = vpack.c.bf16 %v36, %v35
    %v42 = vpack.c.bf16 %v38, %v37
    %vm43 = vcmask 523264
    %v45 = vsel %vm43, %v30, 0
    %47 = vmatpush.bf16.msra.mxu0 0
    %48 = vmatpush.bf16.msra.mxu0 0
    %49 = vmatpush.bf16.msra.mxu0 0
    %50 = vmatpush.bf16.msra.mxu0 0
    %51 = vmatpush.bf16.msra.mxu0 %v42
    %52 = vmatpush.bf16.msra.mxu0 %v41
    %53 = vmatpush.bf16.msra.mxu0 %v40
    %54 = vmatpush.bf16.msra.mxu0 %v39
    %55 = vmatmul.bf16.gmra.mxu0 %v45
    %v56 = vpop.f32.mrf.mxu0
    %v57 = vadd.f32 0.0, %v56
    %v58 = vpop.f32.mrf.mxu0
    %v59 = vadd.f32 0.0, %v58
    %60 = vdwg.mxu0
    %v61 = vadd.f32 %v28, %v57
    %v62 = vadd.f32 %v29, %v59
    %vm63 = vcmask 261120
    %64 = vst.msk [vmem:[#allocation2] sm:$0xff] %vm63, %v61
    %65 = vst.msk [vmem:[#allocation2 + $0x8] sm:$0xff] %vm63, %v62
    // Predicated region
    $region22: #{transformer_forward.19} parent=1 // pred_check
      %p66 = pneg %p19
    $region23: #{transformer_forward.19} parent=1 // pred_check_branch
      %68 = sbr.rel (%p66) target = $region25
    $region24: #{transformer_forward.19} parent=1 // pred_region
      %v69 = vld [vmem:[#allocation2] sm:$0xff]
      %v70 = vld [vmem:[#allocation2 + $0x8] sm:$0xff]
      %v71 = vld [vmem:[%s2] sm:$0x1]
      %v73 = vperm.slane %v71, 0
      %v75 = vadd.f32 %v69, %v73
      %v76 = vadd.f32 %v70, %v73
      %v77 = vld [vmem:[%s3] sm:$0xff]
      %v78 = vld [vmem:[%s3 + $0x8] sm:$0xff]
      %v79 = vadd.f32 %v75, %v77
      %v80 = vadd.f32 %v76, %v78
      %81 = vst.msk [vmem:[#allocation3] sm:$0xff] %vm63, %v79
      %82 = vst.msk [vmem:[#allocation3 + $0x8] sm:$0xff] %vm63, %v80
    $region25: #{transformer_forward.19} parent=1 // pred_fallthru
      _
    // Predicated region
    $region26: #{transformer_forward.19} parent=1 // pred_check
      _
    $region27: #{transformer_forward.19} parent=1 // pred_check_branch
      %84 = sbr.rel (0) target = $region29
    $region28: #{transformer_forward.19} parent=1 // pred_region
      %86 = vsyncadd [#allocation4], 0
      %s87 = sshll.u32 [#allocation3], 4
      %s88 = int_to_ptr.vmem [resolvable:$true] %s87
      %s89 = sshll.u32 %s4, 4
      %s90 = int_to_ptr.hbm [resolvable:$true] %s89
      %95 = dma.vmem_to_hbm [thread:$0]  %s88, 256, %s90, [#allocation4], 128, 128, 8
    $region29: #{transformer_forward.19} parent=1 // pred_fallthru
      _
    // Predicated region
    $region30: #{transformer_forward.19} parent=1 // pred_check
      _
    $region31: #{transformer_forward.19} parent=1 // pred_check_branch
      %97 = sbr.rel (0) target = $region33
    $region32: #{transformer_forward.19} parent=1 // pred_region
      %99 = dma.done [#allocation4], 256
    $region33: #{transformer_forward.19} parent=1 // pred_fallthru
      _
    %100 = vsyncpa [#allocation4], 1

// kernel: transformer_forward.15
$region0: #{transformer_forward.15}
  #allocation0 [shape = 'u32[]', space=smem, size = 0x4, offset = 0x4, fixed_abs, tag = 'smem constant byte address 0x4 - core index']
  #allocation1 [shape = 'u32[72,128]{1,0:T(1,128)}', space=vmem, size = 0x9000, scoped, tag = 'internal scratch']
  #allocation2 [shape = 'f32[16,192]{1,0:T(8,128)}', space=vmem, size = 0x4000, scoped, tag = 'scratch operand']
  %s0 = inlined_call_operand.vmem [shape: f32[16,32], index: 0, kind: input, shape index: {}]
  %s1 = inlined_call_operand.vmem [shape: f32[32,192], index: 1, kind: input, shape index: {}]
  %s2 = inlined_call_operand.vmem [shape: f32[1,32], index: 2, kind: input, shape index: {}]
  %s3 = inlined_call_operand.vmem [shape: f32[1,32], index: 3, kind: input, shape index: {}]
  %s4 = inlined_call_operand.vmem [shape: f32[16,192], index: 4, kind: output, shape index: {}]
  %s5 = sld [smem:[#allocation0]]
  $region34: #{transformer_forward.15} parent=0
    _
  %s7 = ssub.s32 1, %s5
  %s8 = scalar_select 0, %s7, %s5
  // Predicated region
  $region2: #{transformer_forward.15} parent=0 // pred_check
    _
  $region3: #{transformer_forward.15} parent=0 // pred_check_branch
    %10 = sbr.rel (0) target = $region5
  $region4: #{transformer_forward.15} parent=0 // pred_region
    _
  $region5: #{transformer_forward.15} parent=0 // pred_fallthru
    _
  // Predicated region
  $region6: #{transformer_forward.15} parent=0 // pred_check
    _
  $region7: #{transformer_forward.15} parent=0 // pred_check_branch
    %12 = sbr.rel (0) target = $region9
  $region8: #{transformer_forward.15} parent=0 // pred_region
    _
  $region9: #{transformer_forward.15} parent=0 // pred_fallthru
    _
  // Predicated region
  $region10: #{transformer_forward.15} parent=0 // pred_check
    _
  $region11: #{transformer_forward.15} parent=0 // pred_check_branch
    %14 = sbr.rel (0) target = $region13
  $region12: #{transformer_forward.15} parent=0 // pred_region
    _
  $region13: #{transformer_forward.15} parent=0 // pred_fallthru
    _
  // Predicated region
  $region14: #{transformer_forward.15} parent=0 // pred_check
    _
  $region15: #{transformer_forward.15} parent=0 // pred_check_branch
    %16 = sbr.rel (0) target = $region17
  $region16: #{transformer_forward.15} parent=0 // pred_region
    _
  $region17: #{transformer_forward.15} parent=0 // pred_fallthru
    _
  %p18 = scmp.eq.s32.totalorder 0, 0
  // Predicated region
  $region18: #{transformer_forward.15} parent=0 // pred_check
    %p19 = pneg %p18
  $region19: #{transformer_forward.15} parent=0 // pred_check_branch
    %21 = sbr.rel (%p19) target = $region21
  $region20: #{transformer_forward.15} parent=0 // pred_region
    %22 = vst [vmem:[#allocation2] sm:$0xff] 0.0
    %vm23 = vcmask 523264
    %24 = vst.msk [vmem:[#allocation2 + $0x8] sm:$0xff] %vm23, 0.0
    %25 = vst [vmem:[#allocation2 + $0x10] sm:$0xff] 0.0
    %26 = vst.msk [vmem:[#allocation2 + $0x18] sm:$0xff] %vm23, 0.0
  $region21: #{transformer_forward.15} parent=0 // pred_fallthru
    _
  %v27 = vld [vmem:[%s0] sm:$0xff]
  %v28 = vld [vmem:[%s0 + $0x8] sm:$0xff]
  %vm29 = vcmask 261120
  %v30 = vsel %vm29, %v27, 0.0
  %31 = vadd.xlane.f32.xlu0 %v30
  %v32 = vpop.xlane.xlu0 %31
  %v33 = vsel %vm29, %v28, 0.0
  %34 = vadd.xlane.f32.xlu0 %v33
  %v35 = vpop.xlane.xlu0 %34
  %v36 = vrcp.pop 32.0
  %v37 = vmul.f32 32.0, %v36
  %v38 = vsub.f32 1.0, %v37
  %v39 = vmul.f32 %v36, %v38
  %v40 = vadd.f32 %v36, %v39
  %vm41 = vweird.f32 %v36
  %v42 = vsel %vm41, %v36, %v40
  %v43 = vmul.f32 %v32, %v42
  %v44 = vmul.f32 %v35, %v42
  %v45 = vsub.f32 %v27, %v43
  %v46 = vsub.f32 %v28, %v44
  %v47 = vmul.f32 %v45, %v45
  %v48 = vmul.f32 %v46, %v46
  %v49 = vsel %vm29, %v47, 0.0
  %50 = vadd.xlane.f32.xlu0 %v49
  %v51 = vpop.xlane.xlu0 %50
  %v52 = vsel %vm29, %v48, 0.0
  %53 = vadd.xlane.f32.xlu0 %v52
  %v54 = vpop.xlane.xlu0 %53
  %v55 = vmul.f32 %v51, %v42
  %v56 = vmul.f32 %v54, %v42
  %v57 = vadd.f32 %v55, 1e-05
  %v58 = vadd.f32 %v56, 1e-05
  %v59 = vrsqrt.pop %v57
  %v60 = vmul.f32 %v59, %v57
  %v61 = vmul.f32 %v60, %v59
  %v62 = vmul.f32 0.5, %v61
  %v63 = vsub.f32 1.5, %v62
  %v64 = vmul.f32 %v59, %v63
  %vm65 = vweird.f32 %v57
  %vm66 = vweird.f32 %v59
  %vm67 = vmor %vm65, %vm66
  %v68 = vsel %vm67, %v59, %v64
  %v69 = vrsqrt.pop %v58
  %v70 = vmul.f32 %v69, %v58
  %v71 = vmul.f32 %v70, %v69
  %v72 = vmul.f32 0.5, %v71
  %v73 = vsub.f32 1.5, %v72
  %v74 = vmul.f32 %v69, %v73
  %vm75 = vweird.f32 %v58
  %vm76 = vweird.f32 %v69
  %vm77 = vmor %vm75, %vm76
  %v78 = vsel %vm77, %v69, %v74
  %v79 = vmul.f32 %v45, %v68
  %v80 = vmul.f32 %v46, %v78
  %v81 = vld [vmem:[%s2] sm:$0x1]
  %v83 = vperm.slane %v81, 0
  %v85 = vmul.f32 %v79, %v83
  %v86 = vmul.f32 %v80, %v83
  %v87 = vld [vmem:[%s3] sm:$0x1]
  %v89 = vperm.slane %v87, 0
  %v91 = vadd.f32 %v85, %v89
  %v92 = vadd.f32 %v86, %v89
  %v93 = vld [vmem:[#allocation2] sm:$0xff]
  %v94 = vld [vmem:[#allocation2 + $0x8] sm:$0xff]
  %v95 = vld [vmem:[#allocation2 + $0x10] sm:$0xff]
  %v96 = vld [vmem:[#allocation2 + $0x18] sm:$0xff]
  %v97 = vpack.c.bf16 %v92, %v91
  %v98 = vld [vmem:[%s1] sm:$0xff]
  %v99 = vld [vmem:[%s1 + $0x8] sm:$0xff]
  %v100 = vld [vmem:[%s1 + $0x10] sm:$0xff]
  %v101 = vld [vmem:[%s1 + $0x18] sm:$0xff]
  %v102 = vld [vmem:[%s1 + $0x20] sm:$0xff]
  %v103 = vld [vmem:[%s1 + $0x28] sm:$0xff]
  %v104 = vld [vmem:[%s1 + $0x30] sm:$0xff]
  %v105 = vld [vmem:[%s1 + $0x38] sm:$0xff]
  %v106 = vpack.c.bf16 %v100, %v98
  %v107 = vpack.c.bf16 %v101, %v99
  %v108 = vpack.c.bf16 %v104, %v102
  %v109 = vpack.c.bf16 %v105, %v103
  %v111 = vsel %vm29, %v97, 0
  %113 = vmatpush.bf16.msra.mxu0 0
  %114 = vmatpush.bf16.msra.mxu0 0
  %115 = vmatpush.bf16.msra.mxu0 0
  %116 = vmatpush.bf16.msra.mxu0 0
  %117 = vmatpush.bf16.msra.mxu0 0
  %118 = vmatpush.bf16.msra.mxu0 0
  %119 = vmatpush.bf16.msra.mxu0 %v108
  %120 = vmatpush.bf16.msra.mxu0 %v106
  %121 = vmatmul.bf16.gmra.mxu0 %v111
  %v122 = vpop.f32.mrf.mxu0
  %v123 = vadd.f32 0.0, %v122
  %v124 = vpop.f32.mrf.mxu0
  %v125 = vadd.f32 0.0, %v124
  %126 = vdwg.mxu0
  %127 = vmatpush.bf16.msra.mxu0 0
  %128 = vmatpush.bf16.msra.mxu0 0
  %129 = vmatpush.bf16.msra.mxu0 0
  %130 = vmatpush.bf16.msra.mxu0 0
  %131 = vmatpush.bf16.msra.mxu0 0
  %132 = vmatpush.bf16.msra.mxu0 0
  %133 = vmatpush.bf16.msra.mxu0 %v109
  %134 = vmatpush.bf16.msra.mxu0 %v107
  %135 = vmatmul.bf16.gmra.mxu0 %v111
  %v136 = vpop.f32.mrf.mxu0
  %v137 = vadd.f32 0.0, %v136
  %v138 = vpop.f32.mrf.mxu0
  %v139 = vadd.f32 0.0, %v138
  %140 = vdwg.mxu0
  %v141 = vadd.f32 %v93, %v123
  %v142 = vadd.f32 %v94, %v137
  %v143 = vadd.f32 %v95, %v125
  %v144 = vadd.f32 %v96, %v139
  %145 = vst [vmem:[#allocation2] sm:$0xff] %v141
  %vm146 = vcmask 523264
  %147 = vst.msk [vmem:[#allocation2 + $0x8] sm:$0xff] %vm146, %v142
  %148 = vst [vmem:[#allocation2 + $0x10] sm:$0xff] %v143
  %149 = vst.msk [vmem:[#allocation2 + $0x18] sm:$0xff] %vm146, %v144
  // Predicated region
  $region22: #{transformer_forward.15} parent=0 // pred_check
    %p150 = pneg %p18
  $region23: #{transformer_forward.15} parent=0 // pred_check_branch
    %152 = sbr.rel (%p150) target = $region25
  $region24: #{transformer_forward.15} parent=0 // pred_region
    %v153 = vld [vmem:[#allocation2] sm:$0xff]
    %v154 = vld [vmem:[#allocation2 + $0x8] sm:$0xff]
    %v155 = vld [vmem:[#allocation2 + $0x10] sm:$0xff]
    %v156 = vld [vmem:[#allocation2 + $0x18] sm:$0xff]
    %157 = vst [vmem:[%s4] sm:$0xff] %v153
    %158 = vst.msk [vmem:[%s4 + $0x8] sm:$0xff] %vm146, %v154
    %159 = vst [vmem:[%s4 + $0x10] sm:$0xff] %v155
    %160 = vst.msk [vmem:[%s4 + $0x18] sm:$0xff] %vm146, %v156
  $region25: #{transformer_forward.15} parent=0 // pred_fallthru
    _
  // Predicated region
  $region26: #{transformer_forward.15} parent=0 // pred_check
    _
  $region27: #{transformer_forward.15} parent=0 // pred_check_branch
    %162 = sbr.rel (0) target = $region29
  $region28: #{transformer_forward.15} parent=0 // pred_region
    _
  $region29: #{transformer_forward.15} parent=0 // pred_fallthru
    _
  // Predicated region
  $region30: #{transformer_forward.15} parent=0 // pred_check
    _
  $region31: #{transformer_forward.15} parent=0 // pred_check_branch
    %164 = sbr.rel (0) target = $region33
  $region32: #{transformer_forward.15} parent=0 // pred_region
    _
  $region33: #{transformer_forward.15} parent=0 // pred_fallthru
    _

</llo_original>
